<compile_context>
chip_gen: v7x
topology: tpu7x:2x2x1
jax: 0.10.0
libtpu: 0.0.40
codegen_flags: <defaults>
</compile_context>

<pallas_src>
import jax
import jax.numpy as jnp
from jax import lax
from jax.experimental import pallas as pl
from jax.experimental.pallas import tpu as pltpu


def _mha_body(q_ref, k_ref, v_ref, wq_ref, wk_ref, wv_ref, wo_ref,
              out_ref, attn_ref, kproj_ref, vproj_ref, wv_acc_ref, *,
              n_head, d_head, inv_scale, approx_recip):
    """Grid = (B, num_q_tiles); B is "parallel", qi is "arbitrary".

    Block views:
      q_ref            : (1, tq, H)        query tile of current batch element
      k_ref / v_ref    : (1, S,  H)        full key/value sequence (per-b DMA)
      wq/wk/wv_ref     : (H, n_head*D)     all-head projections (resident)
      wo_ref           : (n_head*D, H)     output projection    (resident)
      out_ref          : (1, tq, H)
      attn_ref         : (n_head, 1, tq, S) or None
      kproj/vproj_ref  : (S, n_head*D)     VMEM scratch, cached across qi
      wv_acc_ref       : (tq, n_head*D)    VMEM scratch, concat-head buffer
    """
    qi = pl.program_id(1)

    # K/V projections once per batch element; cached across all query tiles.
    @pl.when(qi == 0)
    def _():
        kproj_ref[...] = jnp.dot(k_ref[0], wk_ref[...],
                                 preferred_element_type=jnp.float32
                                 ).astype(kproj_ref.dtype)
        vproj_ref[...] = jnp.dot(v_ref[0], wv_ref[...],
                                 preferred_element_type=jnp.float32
                                 ).astype(vproj_ref.dtype)

    # Q projection for this tile; 1/sqrt(D) applied to q (S*D multiplies)
    # instead of the (S,S) score matrix.
    q = (jnp.dot(q_ref[0], wq_ref[...], preferred_element_type=jnp.float32)
         * inv_scale).astype(kproj_ref.dtype)                       # (tq, nD)

    for h in range(n_head):                        # static unrolled head loop
        lo, hi = h * d_head, (h + 1) * d_head
        q_h = q[:, lo:hi]                                           # (tq, D)
        k_h = kproj_ref[:, lo:hi]                                   # (S,  D)
        v_h = vproj_ref[:, lo:hi]                                   # (S,  D)

        # scores: contract last dims of both operands -> no materialized k.T.
        s = lax.dot_general(q_h, k_h,
                            dimension_numbers=(((1,), (1,)), ((), ())),
                            preferred_element_type=jnp.float32)     # (tq, S)

        # softmax stays f32 (VPU/EUP path).
        m = jnp.max(s, axis=-1, keepdims=True)
        e = jnp.exp(s - m)
        p = e * pl.reciprocal(jnp.sum(e, axis=-1, keepdims=True),
                              approx=approx_recip)                  # (tq, S)

        if attn_ref is not None:
            attn_ref[h, 0] = p.astype(attn_ref.dtype)

        pv = jnp.dot(p.astype(v_h.dtype), v_h,
                     preferred_element_type=jnp.float32)            # (tq, D)
        wv_acc_ref[:, lo:hi] = pv.astype(wv_acc_ref.dtype)

    # One K=H output projection and a single store.
    out = jnp.dot(wv_acc_ref[...], wo_ref[...],
                  preferred_element_type=jnp.float32)               # (tq, H)
    out_ref[0] = out.astype(out_ref.dtype)


def multi_head_attention(query, key, value, wq, wk, wv, wo_t, *,
                         return_attn=True,
                         mxu_dtype=jnp.bfloat16,
                         attn_dtype=None,
                         out_dtype=None,
                         q_tile=None):
    """
    query/key/value : [B, S, H]
    wq, wk, wv      : [n_head, H, D]   per-head projection (already transposed)
    wo_t            : [H, H]           o_w.weight.T (output = weighted_v @ wo_t)

    Returns (output [B,S,H], attentions [n_head,B,S,S]) or just output when
    return_attn=False.  mxu_dtype=float32 is the exact path; bf16 (default)
    is the MXU fast path with f32 accumulation.
    """
    B, S, H = query.shape
    n_head, _, D = wq.shape
    assert n_head * D == H
    nD = n_head * D
    inv_scale = 1.0 / float(D) ** 0.5

    mxu_dtype = jnp.dtype(mxu_dtype)
    exact = mxu_dtype == jnp.dtype(jnp.float32)
    approx_recip = not exact
    attn_dtype = jnp.dtype(attn_dtype) if attn_dtype is not None else (
        jnp.dtype(jnp.float32) if exact else jnp.dtype(jnp.bfloat16))
    out_dtype = jnp.dtype(out_dtype) if out_dtype is not None else (
        jnp.dtype(jnp.float32) if exact else jnp.dtype(jnp.bfloat16))

    # Pack per-head weights into (H, n_head*D): column block h == head h,
    # matching torch.cat([head_0, head_1, ...], dim=-1) ordering.  Cast all
    # operands to the MXU dtype at the call boundary.
    pack = lambda w: jnp.transpose(w, (1, 0, 2)).reshape(H, nD).astype(mxu_dtype)
    wq_all, wk_all, wv_all = pack(wq), pack(wk), pack(wv)
    wo_all = wo_t.astype(mxu_dtype)
    query = query.astype(mxu_dtype)
    key = key.astype(mxu_dtype)
    value = value.astype(mxu_dtype)

    # Query tile: cap at 128 rows when S tiles cleanly; bf16 needs 16-row
    # alignment (sublane packing), f32 needs 8.
    row_align = 8 if exact else 16
    if q_tile is None:
        if S <= 128:
            q_tile = S
        else:
            q_tile = S
            for cand in (128, 64, 32, 16, 8):
                if S % cand == 0 and cand % row_align == 0:
                    q_tile = cand
                    break
    assert S % q_tile == 0
    assert q_tile == S or q_tile % row_align == 0, (
        f"q_tile must be a multiple of {row_align} or equal S")
    n_qt = S // q_tile

    scratch_shapes = [
        pltpu.VMEM((S, nD), mxu_dtype),        # cached K projection
        pltpu.VMEM((S, nD), mxu_dtype),        # cached V projection
        pltpu.VMEM((q_tile, nD), mxu_dtype),   # concat-head accumulator
    ]

    if return_attn:
        def kernel(q_ref, k_ref, v_ref, wq_ref, wk_ref, wv_ref, wo_ref,
                   out_ref, attn_ref, kproj_ref, vproj_ref, wv_acc_ref):
            _mha_body(q_ref, k_ref, v_ref, wq_ref, wk_ref, wv_ref, wo_ref,
                      out_ref, attn_ref, kproj_ref, vproj_ref, wv_acc_ref,
                      n_head=n_head, d_head=D, inv_scale=inv_scale,
                      approx_recip=approx_recip)
        out_shape = (jax.ShapeDtypeStruct((B, S, H), out_dtype),
                     jax.ShapeDtypeStruct((n_head, B, S, S), attn_dtype))
        out_specs = (
            pl.BlockSpec((1, q_tile, H), lambda b, qi: (b, qi, 0)),
            pl.BlockSpec((n_head, 1, q_tile, S), lambda b, qi: (0, b, qi, 0)),
        )
    else:
        def kernel(q_ref, k_ref, v_ref, wq_ref, wk_ref, wv_ref, wo_ref,
                   out_ref, kproj_ref, vproj_ref, wv_acc_ref):
            _mha_body(q_ref, k_ref, v_ref, wq_ref, wk_ref, wv_ref, wo_ref,
                      out_ref, None, kproj_ref, vproj_ref, wv_acc_ref,
                      n_head=n_head, d_head=D, inv_scale=inv_scale,
                      approx_recip=approx_recip)
        out_shape = jax.ShapeDtypeStruct((B, S, H), out_dtype)
        out_specs = pl.BlockSpec((1, q_tile, H), lambda b, qi: (b, qi, 0))

    in_specs = [
        pl.BlockSpec((1, q_tile, H), lambda b, qi: (b, qi, 0)),   # query tile
        pl.BlockSpec((1, S, H), lambda b, qi: (b, 0, 0)),         # key (per-b)
        pl.BlockSpec((1, S, H), lambda b, qi: (b, 0, 0)),         # value (per-b)
        pl.BlockSpec((H, nD), lambda b, qi: (0, 0)),              # wq (resident)
        pl.BlockSpec((H, nD), lambda b, qi: (0, 0)),              # wk (resident)
        pl.BlockSpec((H, nD), lambda b, qi: (0, 0)),              # wv (resident)
        pl.BlockSpec((H, H), lambda b, qi: (0, 0)),               # wo_t (resident)
    ]

    # Advisory cost estimate (K/V projections now once per batch element).
    itm = mxu_dtype.itemsize
    flops = (2 * B * S * H * nD                 # q projection
             + 2 * 2 * B * S * H * nD           # k/v projections (once per b)
             + 2 * 2 * B * n_head * S * S * D   # scores + p@v
             + 2 * B * S * nD * H)              # output projection
    transcendentals = B * n_head * S * S        # exp in softmax
    bytes_accessed = (itm * (3 * B * S * H + 3 * H * nD + H * H)
                      + out_dtype.itemsize * B * S * H)
    if return_attn:
        bytes_accessed += attn_dtype.itemsize * n_head * B * S * S

    # Per-step VMEM working set -> scoped VMEM limit (with headroom, capped).
    ws = (2 * q_tile * H * itm                 # q block (double-buffered)
          + 2 * 2 * S * H * itm                # k, v blocks
          + 2 * (3 * H * nD + H * H) * itm     # resident weights
          + 2 * S * nD * itm                   # kproj/vproj scratch
          + q_tile * nD * itm                  # concat-head scratch
          + 2 * q_tile * H * out_dtype.itemsize
          + 4 * 3 * q_tile * S)                # f32 scores / softmax temps
    if return_attn:
        ws += 2 * n_head * q_tile * S * attn_dtype.itemsize
    vmem_limit = int(min(max(2 * ws, 32 * 2 ** 20), 48 * 2 ** 20))

    result = pl.pallas_call(
        kernel,
        out_shape=out_shape,
        grid_spec=pltpu.PrefetchScalarGridSpec(
            num_scalar_prefetch=0,
            grid=(B, n_qt),
            in_specs=in_specs,
            out_specs=out_specs,
            scratch_shapes=scratch_shapes,
        ),
        compiler_params=pltpu.CompilerParams(
            # qi must be "arbitrary": K/V-projection scratch is initialized at
            # qi==0 and reused across the qi loop (also avoids duplicating the
            # per-b K/V DMA across TensorCores on v7x).
            dimension_semantics=("parallel", "arbitrary"),
            vmem_limit_bytes=vmem_limit,
        ),
        cost_estimate=pl.CostEstimate(flops=flops,
                                      transcendentals=transcendentals,
                                      bytes_accessed=bytes_accessed),
    )(query, key, value, wq_all, wk_all, wv_all, wo_all)

    return result


def reference_mha(query, key, value, wq, wk, wv, wo_t):
    """Plain-JAX reference matching the PyTorch forward (dropout = identity)."""
    n_head, H, D = wq.shape
    scale = jnp.sqrt(jnp.float32(D))
    head_outs, attns = [], []
    for h in range(n_head):
        q = query @ wq[h]          # (B, S, D)
        k = key @ wk[h]
        v = value @ wv[h]
        scores = jnp.einsum("bqd,bkd->bqk", q, k) / scale
        p = jax.nn.softmax(scores, axis=-1)
        attns.append(p)
        head_outs.append(jnp.einsum("bqk,bkd->bqd", p, v))
    weighted_v = jnp.concatenate(head_outs, axis=-1)   # (B, S, H)
    out = weighted_v @ wo_t
    return out, jnp.stack(attns, axis=0)


if __name__ == "__main__":
    # params: hidden_dim=32, n_head=4 -> attention_dim=8; batch=2, seq=8
    B, S, H, n_head = 2, 8, 32, 4
    D = H // n_head

    key0 = jax.random.PRNGKey(0)
    ks = jax.random.split(key0, 8)

    query = jax.random.normal(ks[0], (B, S, H), dtype=jnp.float32)
    key_in = jax.random.normal(ks[1], (B, S, H), dtype=jnp.float32)
    value = jax.random.normal(ks[2], (B, S, H), dtype=jnp.float32)

    # nn.Linear weight is [out, in]; store the transposed [in, out] form so the
    # kernel computes x @ W directly.
    init = lambda k, shape: jax.random.normal(k, shape, dtype=jnp.float32) * 0.1
    wq = init(ks[3], (n_head, H, D))
    wk = init(ks[4], (n_head, H, D))
    wv = init(ks[5], (n_head, H, D))
    wo = init(ks[6], (H, H))                 # nn.Linear(H, H, bias=False).weight
    wo_t = wo.T                              # output = weighted_v @ wo.T

    out_ref, attn_ref = reference_mha(query, key_in, value, wq, wk, wv, wo_t)

    # 1) Exact path (f32 MXU operands, exact reciprocal) — tight tolerances.
    out, attn = multi_head_attention(query, key_in, value, wq, wk, wv, wo_t,
                                     mxu_dtype=jnp.float32)
    out = jax.block_until_ready(out)
    attn = jax.block_until_ready(attn)
    assert out.shape == (B, S, H)
    assert attn.shape == (n_head, B, S, S)
    assert jnp.allclose(out, out_ref, atol=1e-4, rtol=1e-4), "output mismatch"
    assert jnp.allclose(attn, attn_ref, atol=1e-5, rtol=1e-5), "attention mismatch"

    # 2) Fast path (defaults: bf16 MXU operands + f32 accumulation, approx
    #    reciprocal, bf16 attention and output writeback) — loose tolerances.
    out_bf, attn_bf = multi_head_attention(query, key_in, value, wq, wk, wv, wo_t)
    out_bf = jax.block_until_ready(out_bf)
    attn_bf = jax.block_until_ready(attn_bf)
    assert jnp.allclose(out_bf.astype(jnp.float32), out_ref,
                        atol=5e-2, rtol=5e-2), "bf16 output mismatch"
    assert jnp.allclose(attn_bf.astype(jnp.float32), attn_ref,
                        atol=2e-2, rtol=2e-2), "bf16 attention mismatch"

    # 3) Output-only path (skips the O(S^2) attention-probability writeback).
    out_only = multi_head_attention(query, key_in, value, wq, wk, wv, wo_t,
                                    return_attn=False, mxu_dtype=jnp.float32)
    out_only = jax.block_until_ready(out_only)
    assert jnp.allclose(out_only, out_ref, atol=1e-4, rtol=1e-4), "output-only mismatch"

    # attentions as a per-head list, mirroring the PyTorch return signature
    attentions = [attn[h] for h in range(n_head)]
    assert len(attentions) == n_head

    print("KERNEL_OK")
</pallas_src>

<mosaic_0001>
module attributes {stable_mosaic.version = 11 : i64} {
  func.func @kernel(%arg0: i32, %arg1: i32, %arg2: memref<1x8x32xf32, #tpu.memory_space<vmem>>, %arg3: memref<1x8x32xf32, #tpu.memory_space<vmem>>, %arg4: memref<1x8x32xf32, #tpu.memory_space<vmem>>, %arg5: memref<32x32xf32, #tpu.memory_space<vmem>>, %arg6: memref<32x32xf32, #tpu.memory_space<vmem>>, %arg7: memref<32x32xf32, #tpu.memory_space<vmem>>, %arg8: memref<32x32xf32, #tpu.memory_space<vmem>>, %arg9: memref<1x8x32xf32, #tpu.memory_space<vmem>>, %arg10: memref<4x1x8x8xf32, #tpu.memory_space<vmem>>, %arg11: memref<8x32xf32, #tpu.memory_space<vmem>>, %arg12: memref<8x32xf32, #tpu.memory_space<vmem>>, %arg13: memref<8x32xf32, #tpu.memory_space<vmem>>) attributes {dimension_semantics = [#tpu.dimension_semantics<parallel>, #tpu.dimension_semantics<arbitrary>], iteration_bounds = array<i64: 2, 1>, scalar_prefetch = 0 : i64, scratch_operands = 3 : i64, tpu.core_type = #tpu.core_type<tc>, window_params = [{transform_indices = @transform_0, window_bounds = array<i64: 1, 8, 32>}, {transform_indices = @transform_1, window_bounds = array<i64: 1, 8, 32>}, {transform_indices = @transform_2, window_bounds = array<i64: 1, 8, 32>}, {pipeline_mode = #tpu.pipeline_mode<synchronous>, transform_indices = @transform_3, window_bounds = array<i64: 32, 32>}, {pipeline_mode = #tpu.pipeline_mode<synchronous>, transform_indices = @transform_4, window_bounds = array<i64: 32, 32>}, {pipeline_mode = #tpu.pipeline_mode<synchronous>, transform_indices = @transform_5, window_bounds = array<i64: 32, 32>}, {pipeline_mode = #tpu.pipeline_mode<synchronous>, transform_indices = @transform_6, window_bounds = array<i64: 32, 32>}, {transform_indices = @transform_7, window_bounds = array<i64: 1, 8, 32>}, {transform_indices = @transform_8, window_bounds = array<i64: 4, 1, 8, 8>}]} {
    %c0_i32 = arith.constant 0 : i32
    %0 = arith.cmpi eq, %arg1, %c0_i32 : i32
    %1 = arith.extui %0 : i1 to i32
    %c0_i32_0 = arith.constant 0 : i32
    %2 = arith.cmpi ne, %1, %c0_i32_0 : i32
    scf.if %2 {
      %c0_64 = arith.constant 0 : index
      %c0_65 = arith.constant 0 : index
      %c0_66 = arith.constant 0 : index
      %91 = vector.load %arg3[%c0_64, %c0_65, %c0_66] : memref<1x8x32xf32, #tpu.memory_space<vmem>>, vector<1x8x32xf32>
      %92 = vector.shape_cast %91 : vector<1x8x32xf32> to vector<8x32xf32>
      %c0_67 = arith.constant 0 : index
      %c0_68 = arith.constant 0 : index
      %93 = vector.load %arg6[%c0_67, %c0_68] : memref<32x32xf32, #tpu.memory_space<vmem>>, vector<32x32xf32>
      %cst_69 = arith.constant dense<0.000000e+00> : vector<8x32xf32>
      %94 = tpu.matmul %92, %93, %cst_69 {dimension_numbers = #tpu.dot_dimension_numbers<[1], [0], [0], [1], [0, 0, 1, 1], [], []>} : vector<8x32xf32>, vector<32x32xf32>, vector<8x32xf32> -> vector<8x32xf32>
      %c0_70 = arith.constant 0 : index
      %c0_71 = arith.constant 0 : index
      %95 = vector.load %arg11[%c0_70, %c0_71] : memref<8x32xf32, #tpu.memory_space<vmem>>, vector<8x32xf32>
      tpu.vector_store %arg11[%c0_70, %c0_71], %94 {strides = array<i32>} : memref<8x32xf32, #tpu.memory_space<vmem>>, vector<8x32xf32>,
      %c0_72 = arith.constant 0 : index
      %c0_73 = arith.constant 0 : index
      %c0_74 = arith.constant 0 : index
      %96 = vector.load %arg4[%c0_72, %c0_73, %c0_74] : memref<1x8x32xf32, #tpu.memory_space<vmem>>, vector<1x8x32xf32>
      %97 = vector.shape_cast %96 : vector<1x8x32xf32> to vector<8x32xf32>
      %c0_75 = arith.constant 0 : index
      %c0_76 = arith.constant 0 : index
      %98 = vector.load %arg7[%c0_75, %c0_76] : memref<32x32xf32, #tpu.memory_space<vmem>>, vector<32x32xf32>
      %cst_77 = arith.constant dense<0.000000e+00> : vector<8x32xf32>
      %99 = tpu.matmul %97, %98, %cst_77 {dimension_numbers = #tpu.dot_dimension_numbers<[1], [0], [0], [1], [0, 0, 1, 1], [], []>} : vector<8x32xf32>, vector<32x32xf32>, vector<8x32xf32> -> vector<8x32xf32>
      %c0_78 = arith.constant 0 : index
      %c0_79 = arith.constant 0 : index
      %100 = vector.load %arg12[%c0_78, %c0_79] : memref<8x32xf32, #tpu.memory_space<vmem>>, vector<8x32xf32>
      tpu.vector_store %arg12[%c0_78, %c0_79], %99 {strides = array<i32>} : memref<8x32xf32, #tpu.memory_space<vmem>>, vector<8x32xf32>,
    } else {
    }
    %c0 = arith.constant 0 : index
    %c0_1 = arith.constant 0 : index
    %c0_2 = arith.constant 0 : index
    %3 = vector.load %arg2[%c0, %c0_1, %c0_2] : memref<1x8x32xf32, #tpu.memory_space<vmem>>, vector<1x8x32xf32>
    %4 = vector.shape_cast %3 : vector<1x8x32xf32> to vector<8x32xf32>
    %c0_3 = arith.constant 0 : index
    %c0_4 = arith.constant 0 : index
    %5 = vector.load %arg5[%c0_3, %c0_4] : memref<32x32xf32, #tpu.memory_space<vmem>>, vector<32x32xf32>
    %cst = arith.constant dense<0.000000e+00> : vector<8x32xf32>
    %6 = tpu.matmul %4, %5, %cst {dimension_numbers = #tpu.dot_dimension_numbers<[1], [0], [0], [1], [0, 0, 1, 1], [], []>} : vector<8x32xf32>, vector<32x32xf32>, vector<8x32xf32> -> vector<8x32xf32>
    %cst_5 = arith.constant 0.353553385 : f32
    %7 = vector.broadcast %cst_5 : f32 to vector<8x32xf32>
    %8 = arith.mulf %6, %7 : vector<8x32xf32>
    %9 = vector.extract_strided_slice %8 {offsets = [0, 0], sizes = [8, 8], strides = [1, 1]} : vector<8x32xf32> to vector<8x8xf32>
    %c0_6 = arith.constant 0 : index
    %c0_7 = arith.constant 0 : index
    %10 = vector.load %arg11[%c0_6, %c0_7] : memref<8x32xf32, #tpu.memory_space<vmem>>, vector<8x8xf32>
    %c0_8 = arith.constant 0 : index
    %c0_9 = arith.constant 0 : index
    %11 = vector.load %arg12[%c0_8, %c0_9] : memref<8x32xf32, #tpu.memory_space<vmem>>, vector<8x8xf32>
    %cst_10 = arith.constant dense<0.000000e+00> : vector<8x8xf32>
    %12 = tpu.matmul %9, %10, %cst_10 {dimension_numbers = #tpu.dot_dimension_numbers<[1], [1], [0], [0], [0, 0, 1, 0], [], []>} : vector<8x8xf32>, vector<8x8xf32>, vector<8x8xf32> -> vector<8x8xf32>
    %cst_11 = arith.constant dense<0xFF800000> : vector<8xf32>
    %13 = vector.multi_reduction <maximumf>, %12, %cst_11 [1] : vector<8x8xf32> to vector<8xf32>
    %14 = vector.shape_cast %13 : vector<8xf32> to vector<8x1xf32>
    %15 = vector.broadcast %14 : vector<8x1xf32> to vector<8x8xf32>
    %16 = arith.subf %12, %15 : vector<8x8xf32>
    %17 = math.exp %16 : vector<8x8xf32>
    %cst_12 = arith.constant dense<0.000000e+00> : vector<8xf32>
    %18 = vector.multi_reduction <add>, %17, %cst_12 [1] : vector<8x8xf32> to vector<8xf32>
    %19 = vector.shape_cast %18 : vector<8xf32> to vector<8x1xf32>
    %20 = tpu.reciprocal %19 : vector<8x1xf32> -> vector<8x1xf32>
    %21 = vector.broadcast %20 : vector<8x1xf32> to vector<8x8xf32>
    %22 = arith.mulf %17, %21 : vector<8x8xf32>
    %c0_13 = arith.constant 0 : index
    %c0_14 = arith.constant 0 : index
    %c0_15 = arith.constant 0 : index
    %c0_16 = arith.constant 0 : index
    %23 = vector.load %arg10[%c0_13, %c0_14, %c0_15, %c0_16] : memref<4x1x8x8xf32, #tpu.memory_space<vmem>>, vector<1x1x8x8xf32>
    %24 = vector.shape_cast %23 : vector<1x1x8x8xf32> to vector<8x8xf32>
    %25 = vector.shape_cast %22 : vector<8x8xf32> to vector<1x1x8x8xf32>
    tpu.vector_store %arg10[%c0_13, %c0_14, %c0_15, %c0_16], %25 {strides = array<i32>} : memref<4x1x8x8xf32, #tpu.memory_space<vmem>>, vector<1x1x8x8xf32>,
    %cst_17 = arith.constant dense<0.000000e+00> : vector<8x8xf32>
    %26 = tpu.matmul %22, %11, %cst_17 {dimension_numbers = #tpu.dot_dimension_numbers<[1], [0], [0], [1], [0, 0, 1, 1], [], []>} : vector<8x8xf32>, vector<8x8xf32>, vector<8x8xf32> -> vector<8x8xf32>
    %c0_18 = arith.constant 0 : index
    %c0_19 = arith.constant 0 : index
    %27 = vector.load %arg13[%c0_18, %c0_19] : memref<8x32xf32, #tpu.memory_space<vmem>>, vector<8x8xf32>
    tpu.vector_store %arg13[%c0_18, %c0_19], %26 {strides = array<i32>} : memref<8x32xf32, #tpu.memory_space<vmem>>, vector<8x8xf32>,
    %28 = vector.extract_strided_slice %8 {offsets = [0, 8], sizes = [8, 8], strides = [1, 1]} : vector<8x32xf32> to vector<8x8xf32>
    %c0_20 = arith.constant 0 : index
    %c8 = arith.constant 8 : index
    %29 = vector.load %arg11[%c0_20, %c8] : memref<8x32xf32, #tpu.memory_space<vmem>>, vector<8x8xf32>
    %c0_21 = arith.constant 0 : index
    %c8_22 = arith.constant 8 : index
    %30 = vector.load %arg12[%c0_21, %c8_22] : memref<8x32xf32, #tpu.memory_space<vmem>>, vector<8x8xf32>
    %cst_23 = arith.constant dense<0.000000e+00> : vector<8x8xf32>
    %31 = tpu.matmul %28, %29, %cst_23 {dimension_numbers = #tpu.dot_dimension_numbers<[1], [1], [0], [0], [0, 0, 1, 0], [], []>} : vector<8x8xf32>, vector<8x8xf32>, vector<8x8xf32> -> vector<8x8xf32>
    %cst_24 = arith.constant dense<0xFF800000> : vector<8xf32>
    %32 = vector.multi_reduction <maximumf>, %31, %cst_24 [1] : vector<8x8xf32> to vector<8xf32>
    %33 = vector.shape_cast %32 : vector<8xf32> to vector<8x1xf32>
    %34 = vector.broadcast %33 : vector<8x1xf32> to vector<8x8xf32>
    %35 = arith.subf %31, %34 : vector<8x8xf32>
    %36 = math.exp %35 : vector<8x8xf32>
    %cst_25 = arith.constant dense<0.000000e+00> : vector<8xf32>
    %37 = vector.multi_reduction <add>, %36, %cst_25 [1] : vector<8x8xf32> to vector<8xf32>
    %38 = vector.shape_cast %37 : vector<8xf32> to vector<8x1xf32>
    %39 = tpu.reciprocal %38 : vector<8x1xf32> -> vector<8x1xf32>
    %40 = vector.broadcast %39 : vector<8x1xf32> to vector<8x8xf32>
    %41 = arith.mulf %36, %40 : vector<8x8xf32>
    %c1 = arith.constant 1 : index
    %c0_26 = arith.constant 0 : index
    %c0_27 = arith.constant 0 : index
    %c0_28 = arith.constant 0 : index
    %42 = vector.load %arg10[%c1, %c0_26, %c0_27, %c0_28] : memref<4x1x8x8xf32, #tpu.memory_space<vmem>>, vector<1x1x8x8xf32>
    %43 = vector.shape_cast %42 : vector<1x1x8x8xf32> to vector<8x8xf32>
    %44 = vector.shape_cast %41 : vector<8x8xf32> to vector<1x1x8x8xf32>
    tpu.vector_store %arg10[%c1, %c0_26, %c0_27, %c0_28], %44 {strides = array<i32>} : memref<4x1x8x8xf32, #tpu.memory_space<vmem>>, vector<1x1x8x8xf32>,
    %cst_29 = arith.constant dense<0.000000e+00> : vector<8x8xf32>
    %45 = tpu.matmul %41, %30, %cst_29 {dimension_numbers = #tpu.dot_dimension_numbers<[1], [0], [0], [1], [0, 0, 1, 1], [], []>} : vector<8x8xf32>, vector<8x8xf32>, vector<8x8xf32> -> vector<8x8xf32>
    %c0_30 = arith.constant 0 : index
    %c8_31 = arith.constant 8 : index
    %46 = vector.load %arg13[%c0_30, %c8_31] : memref<8x32xf32, #tpu.memory_space<vmem>>, vector<8x8xf32>
    tpu.vector_store %arg13[%c0_30, %c8_31], %45 {strides = array<i32>} : memref<8x32xf32, #tpu.memory_space<vmem>>, vector<8x8xf32>,
    %47 = vector.extract_strided_slice %8 {offsets = [0, 16], sizes = [8, 8], strides = [1, 1]} : vector<8x32xf32> to vector<8x8xf32>
    %c0_32 = arith.constant 0 : index
    %c16 = arith.constant 16 : index
    %48 = vector.load %arg11[%c0_32, %c16] : memref<8x32xf32, #tpu.memory_space<vmem>>, vector<8x8xf32>
    %c0_33 = arith.constant 0 : index
    %c16_34 = arith.constant 16 : index
    %49 = vector.load %arg12[%c0_33, %c16_34] : memref<8x32xf32, #tpu.memory_space<vmem>>, vector<8x8xf32>
    %cst_35 = arith.constant dense<0.000000e+00> : vector<8x8xf32>
    %50 = tpu.matmul %47, %48, %cst_35 {dimension_numbers = #tpu.dot_dimension_numbers<[1], [1], [0], [0], [0, 0, 1, 0], [], []>} : vector<8x8xf32>, vector<8x8xf32>, vector<8x8xf32> -> vector<8x8xf32>
    %cst_36 = arith.constant dense<0xFF800000> : vector<8xf32>
    %51 = vector.multi_reduction <maximumf>, %50, %cst_36 [1] : vector<8x8xf32> to vector<8xf32>
    %52 = vector.shape_cast %51 : vector<8xf32> to vector<8x1xf32>
    %53 = vector.broadcast %52 : vector<8x1xf32> to vector<8x8xf32>
    %54 = arith.subf %50, %53 : vector<8x8xf32>
    %55 = math.exp %54 : vector<8x8xf32>
    %cst_37 = arith.constant dense<0.000000e+00> : vector<8xf32>
    %56 = vector.multi_reduction <add>, %55, %cst_37 [1] : vector<8x8xf32> to vector<8xf32>
    %57 = vector.shape_cast %56 : vector<8xf32> to vector<8x1xf32>
    %58 = tpu.reciprocal %57 : vector<8x1xf32> -> vector<8x1xf32>
    %59 = vector.broadcast %58 : vector<8x1xf32> to vector<8x8xf32>
    %60 = arith.mulf %55, %59 : vector<8x8xf32>
    %c2 = arith.constant 2 : index
    %c0_38 = arith.constant 0 : index
    %c0_39 = arith.constant 0 : index
    %c0_40 = arith.constant 0 : index
    %61 = vector.load %arg10[%c2, %c0_38, %c0_39, %c0_40] : memref<4x1x8x8xf32, #tpu.memory_space<vmem>>, vector<1x1x8x8xf32>
    %62 = vector.shape_cast %61 : vector<1x1x8x8xf32> to vector<8x8xf32>
    %63 = vector.shape_cast %60 : vector<8x8xf32> to vector<1x1x8x8xf32>
    tpu.vector_store %arg10[%c2, %c0_38, %c0_39, %c0_40], %63 {strides = array<i32>} : memref<4x1x8x8xf32, #tpu.memory_space<vmem>>, vector<1x1x8x8xf32>,
    %cst_41 = arith.constant dense<0.000000e+00> : vector<8x8xf32>
    %64 = tpu.matmul %60, %49, %cst_41 {dimension_numbers = #tpu.dot_dimension_numbers<[1], [0], [0], [1], [0, 0, 1, 1], [], []>} : vector<8x8xf32>, vector<8x8xf32>, vector<8x8xf32> -> vector<8x8xf32>
    %c0_42 = arith.constant 0 : index
    %c16_43 = arith.constant 16 : index
    %65 = vector.load %arg13[%c0_42, %c16_43] : memref<8x32xf32, #tpu.memory_space<vmem>>, vector<8x8xf32>
    tpu.vector_store %arg13[%c0_42, %c16_43], %64 {strides = array<i32>} : memref<8x32xf32, #tpu.memory_space<vmem>>, vector<8x8xf32>,
    %66 = vector.extract_strided_slice %8 {offsets = [0, 24], sizes = [8, 8], strides = [1, 1]} : vector<8x32xf32> to vector<8x8xf32>
    %c0_44 = arith.constant 0 : index
    %c24 = arith.constant 24 : index
    %67 = vector.load %arg11[%c0_44, %c24] : memref<8x32xf32, #tpu.memory_space<vmem>>, vector<8x8xf32>
    %c0_45 = arith.constant 0 : index
    %c24_46 = arith.constant 24 : index
    %68 = vector.load %arg12[%c0_45, %c24_46] : memref<8x32xf32, #tpu.memory_space<vmem>>, vector<8x8xf32>
    %cst_47 = arith.constant dense<0.000000e+00> : vector<8x8xf32>
    %69 = tpu.matmul %66, %67, %cst_47 {dimension_numbers = #tpu.dot_dimension_numbers<[1], [1], [0], [0], [0, 0, 1, 0], [], []>} : vector<8x8xf32>, vector<8x8xf32>, vector<8x8xf32> -> vector<8x8xf32>
    %cst_48 = arith.constant dense<0xFF800000> : vector<8xf32>
    %70 = vector.multi_reduction <maximumf>, %69, %cst_48 [1] : vector<8x8xf32> to vector<8xf32>
    %71 = vector.shape_cast %70 : vector<8xf32> to vector<8x1xf32>
    %72 = vector.broadcast %71 : vector<8x1xf32> to vector<8x8xf32>
    %73 = arith.subf %69, %72 : vector<8x8xf32>
    %74 = math.exp %73 : vector<8x8xf32>
    %cst_49 = arith.constant dense<0.000000e+00> : vector<8xf32>
    %75 = vector.multi_reduction <add>, %74, %cst_49 [1] : vector<8x8xf32> to vector<8xf32>
    %76 = vector.shape_cast %75 : vector<8xf32> to vector<8x1xf32>
    %77 = tpu.reciprocal %76 : vector<8x1xf32> -> vector<8x1xf32>
    %78 = vector.broadcast %77 : vector<8x1xf32> to vector<8x8xf32>
    %79 = arith.mulf %74, %78 : vector<8x8xf32>
    %c3 = arith.constant 3 : index
    %c0_50 = arith.constant 0 : index
    %c0_51 = arith.constant 0 : index
    %c0_52 = arith.constant 0 : index
    %80 = vector.load %arg10[%c3, %c0_50, %c0_51, %c0_52] : memref<4x1x8x8xf32, #tpu.memory_space<vmem>>, vector<1x1x8x8xf32>
    %81 = vector.shape_cast %80 : vector<1x1x8x8xf32> to vector<8x8xf32>
    %82 = vector.shape_cast %79 : vector<8x8xf32> to vector<1x1x8x8xf32>
    tpu.vector_store %arg10[%c3, %c0_50, %c0_51, %c0_52], %82 {strides = array<i32>} : memref<4x1x8x8xf32, #tpu.memory_space<vmem>>, vector<1x1x8x8xf32>,
    %cst_53 = arith.constant dense<0.000000e+00> : vector<8x8xf32>
    %83 = tpu.matmul %79, %68, %cst_53 {dimension_numbers = #tpu.dot_dimension_numbers<[1], [0], [0], [1], [0, 0, 1, 1], [], []>} : vector<8x8xf32>, vector<8x8xf32>, vector<8x8xf32> -> vector<8x8xf32>
    %c0_54 = arith.constant 0 : index
    %c24_55 = arith.constant 24 : index
    %84 = vector.load %arg13[%c0_54, %c24_55] : memref<8x32xf32, #tpu.memory_space<vmem>>, vector<8x8xf32>
    tpu.vector_store %arg13[%c0_54, %c24_55], %83 {strides = array<i32>} : memref<8x32xf32, #tpu.memory_space<vmem>>, vector<8x8xf32>,
    %c0_56 = arith.constant 0 : index
    %c0_57 = arith.constant 0 : index
    %85 = vector.load %arg13[%c0_56, %c0_57] : memref<8x32xf32, #tpu.memory_space<vmem>>, vector<8x32xf32>
    %c0_58 = arith.constant 0 : index
    %c0_59 = arith.constant 0 : index
    %86 = vector.load %arg8[%c0_58, %c0_59] : memref<32x32xf32, #tpu.memory_space<vmem>>, vector<32x32xf32>
    %cst_60 = arith.constant dense<0.000000e+00> : vector<8x32xf32>
    %87 = tpu.matmul %85, %86, %cst_60 {dimension_numbers = #tpu.dot_dimension_numbers<[1], [0], [0], [1], [0, 0, 1, 1], [], []>} : vector<8x32xf32>, vector<32x32xf32>, vector<8x32xf32> -> vector<8x32xf32>
    %c0_61 = arith.constant 0 : index
    %c0_62 = arith.constant 0 : index
    %c0_63 = arith.constant 0 : index
    %88 = vector.load %arg9[%c0_61, %c0_62, %c0_63] : memref<1x8x32xf32, #tpu.memory_space<vmem>>, vector<1x8x32xf32>
    %89 = vector.shape_cast %88 : vector<1x8x32xf32> to vector<8x32xf32>
    %90 = vector.shape_cast %87 : vector<8x32xf32> to vector<1x8x32xf32>
    tpu.vector_store %arg9[%c0_61, %c0_62, %c0_63], %90 {strides = array<i32>} : memref<1x8x32xf32, #tpu.memory_space<vmem>>, vector<1x8x32xf32>,
    return
  }
  func.func @transform_0(%arg0: i32, %arg1: i32) -> (i32, i32, i32) {
    %c0_i32 = arith.constant 0 : i32
    %c0_i32_0 = arith.constant 0 : i32
    return %arg0, %arg1, %c0_i32 : i32, i32, i32
  }
  func.func @transform_1(%arg0: i32, %arg1: i32) -> (i32, i32, i32) {
    %c0_i32 = arith.constant 0 : i32
    %c0_i32_0 = arith.constant 0 : i32
    %c0_i32_1 = arith.constant 0 : i32
    return %arg0, %c0_i32, %c0_i32_0 : i32, i32, i32
  }
  func.func @transform_2(%arg0: i32, %arg1: i32) -> (i32, i32, i32) {
    %c0_i32 = arith.constant 0 : i32
    %c0_i32_0 = arith.constant 0 : i32
    %c0_i32_1 = arith.constant 0 : i32
    return %arg0, %c0_i32, %c0_i32_0 : i32, i32, i32
  }
  func.func @transform_3(%arg0: i32, %arg1: i32) -> (i32, i32) {
    %c0_i32 = arith.constant 0 : i32
    %c0_i32_0 = arith.constant 0 : i32
    %c0_i32_1 = arith.constant 0 : i32
    return %c0_i32, %c0_i32_0 : i32, i32
  }
  func.func @transform_4(%arg0: i32, %arg1: i32) -> (i32, i32) {
    %c0_i32 = arith.constant 0 : i32
    %c0_i32_0 = arith.constant 0 : i32
    %c0_i32_1 = arith.constant 0 : i32
    return %c0_i32, %c0_i32_0 : i32, i32
  }
  func.func @transform_5(%arg0: i32, %arg1: i32) -> (i32, i32) {
    %c0_i32 = arith.constant 0 : i32
    %c0_i32_0 = arith.constant 0 : i32
    %c0_i32_1 = arith.constant 0 : i32
    return %c0_i32, %c0_i32_0 : i32, i32
  }
  func.func @transform_6(%arg0: i32, %arg1: i32) -> (i32, i32) {
    %c0_i32 = arith.constant 0 : i32
    %c0_i32_0 = arith.constant 0 : i32
    %c0_i32_1 = arith.constant 0 : i32
    return %c0_i32, %c0_i32_0 : i32, i32
  }
  func.func @transform_7(%arg0: i32, %arg1: i32) -> (i32, i32, i32) {
    %c0_i32 = arith.constant 0 : i32
    %c0_i32_0 = arith.constant 0 : i32
    return %arg0, %arg1, %c0_i32 : i32, i32, i32
  }
  func.func @transform_8(%arg0: i32, %arg1: i32) -> (i32, i32, i32, i32) {
    %c0_i32 = arith.constant 0 : i32
    %c0_i32_0 = arith.constant 0 : i32
    %c0_i32_1 = arith.constant 0 : i32
    return %c0_i32, %arg0, %arg1, %c0_i32_0 : i32, i32, i32, i32
  }
}

</mosaic_0001>

<llo_original>
// kernel: tpu_custom_call.1
$region0: #{tpu_custom_call.1}
  #allocation0 [shape = 'u32[]', space=smem, size = 0x4, offset = 0x4, fixed_abs, tag = 'smem constant byte address 0x4 - core index']
  #allocation1 [shape = 'u32[144,128]{1,0:T(1,128)}', space=vmem, size = 0x12000, scoped, tag = 'internal scratch']
  #allocation2 [shape = 'f32[8,32]{1,0:T(8,128)}', space=vmem, size = 0x1000, scoped, tag = 'scratch operand']
  #allocation3 [shape = 'f32[8,32]{1,0:T(8,128)}', space=vmem, size = 0x1000, scoped, tag = 'scratch operand']
  #allocation4 [shape = 'f32[8,32]{1,0:T(8,128)}', space=vmem, size = 0x1000, scoped, tag = 'scratch operand']
  %s0 = inlined_call_operand.hbm [shape: f32[2,8,32], index: 0, kind: input, shape index: {}]
  %s1 = inlined_call_operand.hbm [shape: f32[2,8,32], index: 1, kind: input, shape index: {}]
  %s2 = inlined_call_operand.hbm [shape: f32[2,8,32], index: 2, kind: input, shape index: {}]
  %s3 = inlined_call_operand.hbm [shape: f32[32,32], index: 3, kind: input, shape index: {}]
  %s4 = inlined_call_operand.hbm [shape: f32[32,32], index: 4, kind: input, shape index: {}]
  %s5 = inlined_call_operand.hbm [shape: f32[32,32], index: 5, kind: input, shape index: {}]
  %s6 = inlined_call_operand.hbm [shape: f32[32,32], index: 6, kind: input, shape index: {}]
  %s7 = inlined_call_operand.hbm [shape: f32[2,8,32], index: 7, kind: output, shape index: {0}]
  %s8 = inlined_call_operand.hbm [shape: f32[4,2,8,8], index: 8, kind: output, shape index: {1}]
  %9 = xla_tuple %s7, %s8
  %s10 = sld [smem:[#allocation0]]
  $region101: #{tpu_custom_call.1} parent=0
    _
  %s12 = ssub.s32 1, %s10
  %s13 = scalar_select 0, %s12, %s10
  $region1: #{tpu_custom_call.1} parent=0
    #allocation5 [shape = 'u8[8192]{0}', space=vmem, size = 0x2000, scoped, tag = 'input window, operand 0']
    #allocation6 [shape = 's32[2]{0}', space=sflag, size = 0x8, scoped, tag = 'scoped memory for tpu_custom_call.1']
    #allocation7 [shape = 's32[2]{0}', space=sflag, size = 0x8, scoped, tag = 'scoped memory for tpu_custom_call.1']
    #allocation8 [shape = 'u8[8192]{0}', space=vmem, size = 0x2000, scoped, tag = 'input window, operand 1']
    #allocation9 [shape = 's32[2]{0}', space=sflag, size = 0x8, scoped, tag = 'scoped memory for tpu_custom_call.1']
    #allocation10 [shape = 'u8[8192]{0}', space=vmem, size = 0x2000, scoped, tag = 'input window, operand 2']
    #allocation11 [shape = 'u8[16384]{0}', space=vmem, size = 0x4000, scoped, tag = 'input window, operand 3, single buffered']
    #allocation12 [shape = 's32[1]{0}', space=sflag, size = 0x4, scoped, tag = 'scoped memory for tpu_custom_call.1']
    #allocation13 [shape = 'u8[16384]{0}', space=vmem, size = 0x4000, scoped, tag = 'input window, operand 4, single buffered']
    #allocation14 [shape = 'u8[16384]{0}', space=vmem, size = 0x4000, scoped, tag = 'input window, operand 5, single buffered']
    #allocation15 [shape = 's32[1]{0}', space=sflag, size = 0x4, scoped, tag = 'scoped memory for tpu_custom_call.1']
    #allocation16 [shape = 'u8[16384]{0}', space=vmem, size = 0x4000, scoped, tag = 'input window, operand 6, single buffered']
    #allocation17 [shape = 'u8[8192]{0}', space=vmem, size = 0x2000, scoped, tag = 'output window, operand 0']
    #allocation18 [shape = 'u8[32768]{0}', space=vmem, size = 0x8000, scoped, tag = 'output window, operand 1']
    #allocation19 [shape = 's32[2]{0}', space=sflag, size = 0x8, scoped, tag = 'scoped memory for tpu_custom_call.1']
    %14 = vsyncpa [#allocation6], 0
    %s15 = scalar_lea.sflag [#allocation6], 1
    %16 = vsyncpa %s15, 0
    %17 = vsyncpa [#allocation9], 0
    %s18 = scalar_lea.sflag [#allocation9], 1
    %19 = vsyncpa %s18, 0
    %20 = vsyncpa [#allocation12], 0
    %21 = vsyncpa [#allocation15], 0
    %22 = vsyncpa [#allocation7], 0
    %s23 = scalar_lea.sflag [#allocation7], 1
    %24 = vsyncpa %s23, 0
    %25 = vsyncpa [#allocation19], 0
    %s26 = scalar_lea.sflag [#allocation19], 1
    %27 = vsyncpa %s26, 0
    loop: start=0, step=1, limit=4
    $region2: #{tpu_custom_call.1} parent=1 // loop_pre_header
      _
    $region3: #{tpu_custom_call.1} parent=1 // loop_header
      %s29 = sphi 0, %s33
      %p30 = scmp.ge.s32.totalorder %s29, 4
      %s36 = sphi 0, %s48
      %s37 = sphi 0, %s44
      %s38 = sphi 0, %s36
      %s39 = sphi 0, %s37
      %s40 = sphi 0, %s38
      %s41 = sphi 0, %s39
      %s53 = sphi 0, %s55
      %s56 = sphi 0, %s53
      %s57 = sphi 0, %s56
      %s73 = sphi 0, %s57
      %s79 = sphi 0, %s81
      %s82 = sphi 0, %s79
      %s83 = sphi 0, %s82
      %s99 = sphi 0, %s83
      %s105 = sphi 0, %s107
      %s108 = sphi 0, %s105
      %s109 = sphi 0, %s108
      %s125 = sphi 0, %s109
      %s129 = sphi 0, %s129
      %s131 = sphi 0, %s129
      %s132 = sphi 0, %s131
      %s146 = sphi 0, %s132
      %s150 = sphi 0, %s150
      %s152 = sphi 0, %s150
      %s153 = sphi 0, %s152
      %s167 = sphi 0, %s153
      %s171 = sphi 0, %s171
      %s173 = sphi 0, %s171
      %s174 = sphi 0, %s173
      %s188 = sphi 0, %s174
      %s192 = sphi 0, %s192
      %s194 = sphi 0, %s192
      %s195 = sphi 0, %s194
      %s209 = sphi 0, %s195
      %s217 = sphi 0, %s219
      %s220 = sphi 0, %s217
      %s221 = sphi 0, %s220
      %s237 = sphi 0, %s221
      %s245 = sphi 0, %s247
      %s248 = sphi 0, %s245
      %s249 = sphi 0, %s248
      %s265 = sphi 0, %s249
    $region4: #{tpu_custom_call.1} parent=1 // loop_header_branch
      %32 = sbr.rel (%p30) target = $region8
    $region5: #{tpu_custom_call.1} parent=1 // loop_body
      %s34 = ssub.s32 %s29, 1
      %s35 = ssub.s32 %s29, 2
      %s42 = sadd.s32 1, %s37
      %p43 = scmp.ge.s32.totalorder %s42, 1
      %s44 = scalar_select %p43, 0, %s42
      %s45 = sadd.s32 1, %s36
      %s46 = scalar_select %p43, %s45, %s36
      %p47 = scmp.ge.s32.totalorder %s46, 2
      %s48 = scalar_select %p47, 0, %s46
      %s49 = ssub.s32 %s36, %s48
      %s50 = ssub.s32 %s37, %s44
      %s51 = sor.u32 %s49, %s50
      %p52 = scmp.eq.s32.totalorder %s51, 0
      %s54 = sadd.s32 %s53, 1
      %s55 = scalar_select %p52, %s53, %s54
      %p58 = pneg %p52
      %p59 = scmp.eq.s32.totalorder %s29, 1
      %p60 = por %p58, %p59
      %p61 = scmp.ne.s32.totalorder %s53, %s56
      %p62 = scmp.eq.s32.totalorder %s29, 0
      %p63 = por %p61, %p62
      %p64 = scmp.ne.s32.totalorder %s53, %s56
      %p65 = scmp.eq.s32.totalorder %s34, 1
      %p66 = por %p64, %p65
      %p67 = scmp.ne.s32.totalorder %s56, %s57
      %p68 = scmp.eq.s32.totalorder %s34, 0
      %p69 = por %p67, %p68
      %p70 = scmp.ne.s32.totalorder %s56, %s57
      %p71 = scmp.eq.s32.totalorder %s35, 1
      %p72 = por %p70, %p71
      %p74 = scmp.ne.s32.totalorder %s57, %s73
      %p75 = scmp.eq.s32.totalorder %s35, 0
      %p76 = por %p74, %p75
      %s77 = ssub.s32 %s36, %s48
      %p78 = scmp.eq.s32.totalorder %s77, 0
      %s80 = sadd.s32 %s79, 1
      %s81 = scalar_select %p78, %s79, %s80
      %p84 = pneg %p78
      %p85 = scmp.eq.s32.totalorder %s29, 1
      %p86 = por %p84, %p85
      %p87 = scmp.ne.s32.totalorder %s79, %s82
      %p88 = scmp.eq.s32.totalorder %s29, 0
      %p89 = por %p87, %p88
      %p90 = scmp.ne.s32.totalorder %s79, %s82
      %p91 = scmp.eq.s32.totalorder %s34, 1
      %p92 = por %p90, %p91
      %p93 = scmp.ne.s32.totalorder %s82, %s83
      %p94 = scmp.eq.s32.totalorder %s34, 0
      %p95 = por %p93, %p94
      %p96 = scmp.ne.s32.totalorder %s82, %s83
      %p97 = scmp.eq.s32.totalorder %s35, 1
      %p98 = por %p96, %p97
      %p100 = scmp.ne.s32.totalorder %s83, %s99
      %p101 = scmp.eq.s32.totalorder %s35, 0
      %p102 = por %p100, %p101
      %s103 = ssub.s32 %s36, %s48
      %p104 = scmp.eq.s32.totalorder %s103, 0
      %s106 = sadd.s32 %s105, 1
      %s107 = scalar_select %p104, %s105, %s106
      %p110 = pneg %p104
      %p111 = scmp.eq.s32.totalorder %s29, 1
      %p112 = por %p110, %p111
      %p113 = scmp.ne.s32.totalorder %s105, %s108
      %p114 = scmp.eq.s32.totalorder %s29, 0
      %p115 = por %p113, %p114
      %p116 = scmp.ne.s32.totalorder %s105, %s108
      %p117 = scmp.eq.s32.totalorder %s34, 1
      %p118 = por %p116, %p117
      %p119 = scmp.ne.s32.totalorder %s108, %s109
      %p120 = scmp.eq.s32.totalorder %s34, 0
      %p121 = por %p119, %p120
      %p122 = scmp.ne.s32.totalorder %s108, %s109
      %p123 = scmp.eq.s32.totalorder %s35, 1
      %p124 = por %p122, %p123
      %p126 = scmp.ne.s32.totalorder %s109, %s125
      %p127 = scmp.eq.s32.totalorder %s35, 0
      %p128 = por %p126, %p127
      %s130 = sadd.s32 %s129, 1
      %p133 = scmp.eq.s32.totalorder %s29, 1
      %p134 = scmp.ne.s32.totalorder %s129, %s131
      %p135 = scmp.eq.s32.totalorder %s29, 0
      %p136 = por %p134, %p135
      %p137 = scmp.ne.s32.totalorder %s129, %s131
      %p138 = scmp.eq.s32.totalorder %s34, 1
      %p139 = por %p137, %p138
      %p140 = scmp.ne.s32.totalorder %s131, %s132
      %p141 = scmp.eq.s32.totalorder %s34, 0
      %p142 = por %p140, %p141
      %p143 = scmp.ne.s32.totalorder %s131, %s132
      %p144 = scmp.eq.s32.totalorder %s35, 1
      %p145 = por %p143, %p144
      %p147 = scmp.ne.s32.totalorder %s132, %s146
      %p148 = scmp.eq.s32.totalorder %s35, 0
      %p149 = por %p147, %p148
      %s151 = sadd.s32 %s150, 1
      %p154 = scmp.eq.s32.totalorder %s29, 1
      %p155 = scmp.ne.s32.totalorder %s150, %s152
      %p156 = scmp.eq.s32.totalorder %s29, 0
      %p157 = por %p155, %p156
      %p158 = scmp.ne.s32.totalorder %s150, %s152
      %p159 = scmp.eq.s32.totalorder %s34, 1
      %p160 = por %p158, %p159
      %p161 = scmp.ne.s32.totalorder %s152, %s153
      %p162 = scmp.eq.s32.totalorder %s34, 0
      %p163 = por %p161, %p162
      %p164 = scmp.ne.s32.totalorder %s152, %s153
      %p165 = scmp.eq.s32.totalorder %s35, 1
      %p166 = por %p164, %p165
      %p168 = scmp.ne.s32.totalorder %s153, %s167
      %p169 = scmp.eq.s32.totalorder %s35, 0
      %p170 = por %p168, %p169
      %s172 = sadd.s32 %s171, 1
      %p175 = scmp.eq.s32.totalorder %s29, 1
      %p176 = scmp.ne.s32.totalorder %s171, %s173
      %p177 = scmp.eq.s32.totalorder %s29, 0
      %p178 = por %p176, %p177
      %p179 = scmp.ne.s32.totalorder %s171, %s173
      %p180 = scmp.eq.s32.totalorder %s34, 1
      %p181 = por %p179, %p180
      %p182 = scmp.ne.s32.totalorder %s173, %s174
      %p183 = scmp.eq.s32.totalorder %s34, 0
      %p184 = por %p182, %p183
      %p185 = scmp.ne.s32.totalorder %s173, %s174
      %p186 = scmp.eq.s32.totalorder %s35, 1
      %p187 = por %p185, %p186
      %p189 = scmp.ne.s32.totalorder %s174, %s188
      %p190 = scmp.eq.s32.totalorder %s35, 0
      %p191 = por %p189, %p190
      %s193 = sadd.s32 %s192, 1
      %p196 = scmp.eq.s32.totalorder %s29, 1
      %p197 = scmp.ne.s32.totalorder %s192, %s194
      %p198 = scmp.eq.s32.totalorder %s29, 0
      %p199 = por %p197, %p198
      %p200 = scmp.ne.s32.totalorder %s192, %s194
      %p201 = scmp.eq.s32.totalorder %s34, 1
      %p202 = por %p200, %p201
      %p203 = scmp.ne.s32.totalorder %s194, %s195
      %p204 = scmp.eq.s32.totalorder %s34, 0
      %p205 = por %p203, %p204
      %p206 = scmp.ne.s32.totalorder %s194, %s195
      %p207 = scmp.eq.s32.totalorder %s35, 1
      %p208 = por %p206, %p207
      %p210 = scmp.ne.s32.totalorder %s195, %s209
      %p211 = scmp.eq.s32.totalorder %s35, 0
      %p212 = por %p210, %p211
      %s213 = ssub.s32 %s36, %s48
      %s214 = ssub.s32 %s37, %s44
      %s215 = sor.u32 %s213, %s214
      %p216 = scmp.eq.s32.totalorder %s215, 0
      %s218 = sadd.s32 %s217, 1
      %s219 = scalar_select %p216, %s217, %s218
      %p222 = pneg %p216
      %p223 = scmp.eq.s32.totalorder %s29, 1
      %p224 = por %p222, %p223
      %p225 = scmp.ne.s32.totalorder %s217, %s220
      %p226 = scmp.eq.s32.totalorder %s29, 0
      %p227 = por %p225, %p226
      %p228 = scmp.ne.s32.totalorder %s217, %s220
      %p229 = scmp.eq.s32.totalorder %s34, 1
      %p230 = por %p228, %p229
      %p231 = scmp.ne.s32.totalorder %s220, %s221
      %p232 = scmp.eq.s32.totalorder %s34, 0
      %p233 = por %p231, %p232
      %p234 = scmp.ne.s32.totalorder %s220, %s221
      %p235 = scmp.eq.s32.totalorder %s35, 1
      %p236 = por %p234, %p235
      %p238 = scmp.ne.s32.totalorder %s221, %s237
      %p239 = scmp.eq.s32.totalorder %s35, 0
      %p240 = por %p238, %p239
      %s241 = ssub.s32 %s36, %s48
      %s242 = ssub.s32 %s37, %s44
      %s243 = sor.u32 %s241, %s242
      %p244 = scmp.eq.s32.totalorder %s243, 0
      %s246 = sadd.s32 %s245, 1
      %s247 = scalar_select %p244, %s245, %s246
      %p250 = pneg %p244
      %p251 = scmp.eq.s32.totalorder %s29, 1
      %p252 = por %p250, %p251
      %p253 = scmp.ne.s32.totalorder %s245, %s248
      %p254 = scmp.eq.s32.totalorder %s29, 0
      %p255 = por %p253, %p254
      %p256 = scmp.ne.s32.totalorder %s245, %s248
      %p257 = scmp.eq.s32.totalorder %s34, 1
      %p258 = por %p256, %p257
      %p259 = scmp.ne.s32.totalorder %s248, %s249
      %p260 = scmp.eq.s32.totalorder %s34, 0
      %p261 = por %p259, %p260
      %p262 = scmp.ne.s32.totalorder %s248, %s249
      %p263 = scmp.eq.s32.totalorder %s35, 1
      %p264 = por %p262, %p263
      %p266 = scmp.ne.s32.totalorder %s249, %s265
      %p267 = scmp.eq.s32.totalorder %s35, 0
      %p268 = por %p266, %p267
      %p269 = scmp.le.s32.totalorder 1, %s29
      %p270 = scmp.lt.s32.totalorder %s29, 3
      %p271 = pnand %p269, %p270
      %p272 = pneg %p271
      // Predicated region
      $region9: #{tpu_custom_call.1} parent=5 // pred_check
        _
      $region10: #{tpu_custom_call.1} parent=5 // pred_check_branch
        %274 = sbr.rel (%p271) target = $region12
      $region11: #{tpu_custom_call.1} parent=5 // pred_region
        %s275 = ssub.s32 %s29, 1
        // Predicated region
        $region13: #{tpu_custom_call.1} parent=11 // pred_check
          %p276 = pneg %p142
        $region14: #{tpu_custom_call.1} parent=11 // pred_check_branch
          %278 = sbr.rel (%p276) target = $region16
        $region15: #{tpu_custom_call.1} parent=11 // pred_region
          %s280 = ssub.s32 512, 512
          %281 = vsyncadd [#allocation12], %s280
          %s282 = sshll.u32 [#allocation11], 4
          %s283 = int_to_ptr.vmem [resolvable:$true] %s282
          %288 = dma.hbm_to_vmem [thread:$0]  %s3, 512, %s283, [#allocation12], 128, 128, 8
        $region16: #{tpu_custom_call.1} parent=11 // pred_fallthru
          _
        // Predicated region
        $region17: #{tpu_custom_call.1} parent=11 // pred_check
          %p289 = pneg %p163
        $region18: #{tpu_custom_call.1} parent=11 // pred_check_branch
          %291 = sbr.rel (%p289) target = $region20
        $region19: #{tpu_custom_call.1} parent=11 // pred_region
          %s293 = ssub.s32 512, 512
          %294 = vsyncadd [#allocation12], %s293
          %s295 = sshll.u32 [#allocation13], 4
          %s296 = int_to_ptr.vmem [resolvable:$true] %s295
          %301 = dma.hbm_to_vmem [thread:$0]  %s4, 512, %s296, [#allocation12], 128, 128, 8
        $region20: #{tpu_custom_call.1} parent=11 // pred_fallthru
          _
        // Predicated region
        $region21: #{tpu_custom_call.1} parent=11 // pred_check
          %p302 = pneg %p184
        $region22: #{tpu_custom_call.1} parent=11 // pred_check_branch
          %304 = sbr.rel (%p302) target = $region24
        $region23: #{tpu_custom_call.1} parent=11 // pred_region
          %s306 = ssub.s32 512, 512
          %307 = vsyncadd [#allocation15], %s306
          %s308 = sshll.u32 [#allocation14], 4
          %s309 = int_to_ptr.vmem [resolvable:$true] %s308
          %314 = dma.hbm_to_vmem [thread:$0]  %s5, 512, %s309, [#allocation15], 128, 128, 8
        $region24: #{tpu_custom_call.1} parent=11 // pred_fallthru
          _
        // Predicated region
        $region25: #{tpu_custom_call.1} parent=11 // pred_check
          %p315 = pneg %p205
        $region26: #{tpu_custom_call.1} parent=11 // pred_check_branch
          %317 = sbr.rel (%p315) target = $region28
        $region27: #{tpu_custom_call.1} parent=11 // pred_region
          %s319 = ssub.s32 512, 512
          %320 = vsyncadd [#allocation15], %s319
          %s321 = sshll.u32 [#allocation16], 4
          %s322 = int_to_ptr.vmem [resolvable:$true] %s321
          %327 = dma.hbm_to_vmem [thread:$0]  %s6, 512, %s322, [#allocation15], 128, 128, 8
        $region28: #{tpu_custom_call.1} parent=11 // pred_fallthru
          _
      $region12: #{tpu_custom_call.1} parent=5 // pred_fallthru
        _
      %p328 = scmp.lt.s32.totalorder %s29, 2
      // Predicated region
      $region29: #{tpu_custom_call.1} parent=5 // pred_check
        %p329 = pneg %p328
      $region30: #{tpu_custom_call.1} parent=5 // pred_check_branch
        %331 = sbr.rel (%p329) target = $region32
      $region31: #{tpu_custom_call.1} parent=5 // pred_region
        // Predicated region
        $region33: #{tpu_custom_call.1} parent=31 // pred_check
          %p332 = pneg %p63
        $region34: #{tpu_custom_call.1} parent=31 // pred_check_branch
          %334 = sbr.rel (%p332) target = $region36
        $region35: #{tpu_custom_call.1} parent=31 // pred_region
          %s335 = sand.u32 %s53, 1
          %s336 = scalar_lea.sflag [#allocation6], %s335
          %s337 = sand.u32 %s53, 1
          %s338 = smul.addr %s337, 8
          %s339 = scalar_lea.vmem [#allocation5], %s338
          %s341 = ssub.s32 128, 128
          %342 = vsyncadd %s336, %s341
          %s343 = sadd.s32 %s37, %s36
          %s344 = smul.addr %s343, 128
          %s345 = scalar_lea.hbm %s0, %s344
          %s347 = sshll.u32 %s339, 4
          %s348 = int_to_ptr.vmem [resolvable:$true] %s347
          %350 = dma.hbm_to_vmem [thread:$0]  %s345, 128, %s348, %s336
        $region36: #{tpu_custom_call.1} parent=31 // pred_fallthru
          _
        // Predicated region
        $region37: #{tpu_custom_call.1} parent=31 // pred_check
          %p351 = pneg %p89
        $region38: #{tpu_custom_call.1} parent=31 // pred_check_branch
          %353 = sbr.rel (%p351) target = $region40
        $region39: #{tpu_custom_call.1} parent=31 // pred_region
          %s354 = sand.u32 %s29, 1
          %s355 = scalar_lea.sflag [#allocation9], %s354
          %s356 = sand.u32 %s79, 1
          %s357 = smul.addr %s356, 8
          %s358 = scalar_lea.vmem [#allocation8], %s357
          %s360 = ssub.s32 128, 128
          %361 = vsyncadd %s355, %s360
          %s362 = smul.addr %s36, 128
          %s363 = scalar_lea.hbm %s1, %s362
          %s365 = sshll.u32 %s358, 4
          %s366 = int_to_ptr.vmem [resolvable:$true] %s365
          %368 = dma.hbm_to_vmem [thread:$0]  %s363, 128, %s366, %s355
        $region40: #{tpu_custom_call.1} parent=31 // pred_fallthru
          _
        // Predicated region
        $region41: #{tpu_custom_call.1} parent=31 // pred_check
          %p369 = pneg %p115
        $region42: #{tpu_custom_call.1} parent=31 // pred_check_branch
          %371 = sbr.rel (%p369) target = $region44
        $region43: #{tpu_custom_call.1} parent=31 // pred_region
          %s372 = sand.u32 %s29, 1
          %s373 = scalar_lea.sflag [#allocation9], %s372
          %s374 = sand.u32 %s105, 1
          %s375 = smul.addr %s374, 8
          %s376 = scalar_lea.vmem [#allocation10], %s375
          %s378 = ssub.s32 128, 128
          %379 = vsyncadd %s373, %s378
          %s380 = smul.addr %s36, 128
          %s381 = scalar_lea.hbm %s2, %s380
          %s383 = sshll.u32 %s376, 4
          %s384 = int_to_ptr.vmem [resolvable:$true] %s383
          %386 = dma.hbm_to_vmem [thread:$0]  %s381, 128, %s384, %s373
        $region44: #{tpu_custom_call.1} parent=31 // pred_fallthru
          _
      $region32: #{tpu_custom_call.1} parent=5 // pred_fallthru
        _
      %p387 = scmp.le.s32.totalorder 1, %s29
      %p388 = scmp.lt.s32.totalorder %s29, 3
      %p389 = pnand %p387, %p388
      %p390 = pneg %p389
      // Predicated region
      $region45: #{tpu_custom_call.1} parent=5 // pred_check
        _
      $region46: #{tpu_custom_call.1} parent=5 // pred_check_branch
        %392 = sbr.rel (%p389) target = $region48
      $region47: #{tpu_custom_call.1} parent=5 // pred_region
        %s393 = ssub.s32 %s29, 1
        %s394 = sand.u32 %s56, 1
        %s395 = scalar_lea.sflag [#allocation6], %s394
        %s396 = sand.u32 %s56, 1
        %s397 = smul.addr %s396, 8
        %s398 = scalar_lea.vmem [#allocation5], %s397
        // Predicated region
        $region49: #{tpu_custom_call.1} parent=47 // pred_check
          %p399 = pneg %p69
        $region50: #{tpu_custom_call.1} parent=47 // pred_check_branch
          %401 = sbr.rel (%p399) target = $region52
        $region51: #{tpu_custom_call.1} parent=47 // pred_region
          %402 = dma.done %s395, 128
        $region52: #{tpu_custom_call.1} parent=47 // pred_fallthru
          _
        %s403 = sand.u32 %s34, 1
        %s404 = scalar_lea.sflag [#allocation9], %s403
        %s405 = sand.u32 %s82, 1
        %s406 = smul.addr %s405, 8
        %s407 = scalar_lea.vmem [#allocation8], %s406
        // Predicated region
        $region53: #{tpu_custom_call.1} parent=47 // pred_check
          %p408 = pneg %p95
        $region54: #{tpu_custom_call.1} parent=47 // pred_check_branch
          %410 = sbr.rel (%p408) target = $region56
        $region55: #{tpu_custom_call.1} parent=47 // pred_region
          %411 = dma.done %s404, 128
        $region56: #{tpu_custom_call.1} parent=47 // pred_fallthru
          _
        %s412 = sand.u32 %s34, 1
        %s413 = scalar_lea.sflag [#allocation9], %s412
        %s414 = sand.u32 %s108, 1
        %s415 = smul.addr %s414, 8
        %s416 = scalar_lea.vmem [#allocation10], %s415
        // Predicated region
        $region57: #{tpu_custom_call.1} parent=47 // pred_check
          %p417 = pneg %p121
        $region58: #{tpu_custom_call.1} parent=47 // pred_check_branch
          %419 = sbr.rel (%p417) target = $region60
        $region59: #{tpu_custom_call.1} parent=47 // pred_region
          %420 = dma.done %s413, 128
        $region60: #{tpu_custom_call.1} parent=47 // pred_fallthru
          _
        // Predicated region
        $region61: #{tpu_custom_call.1} parent=47 // pred_check
          %p421 = pneg %p142
        $region62: #{tpu_custom_call.1} parent=47 // pred_check_branch
          %423 = sbr.rel (%p421) target = $region64
        $region63: #{tpu_custom_call.1} parent=47 // pred_region
          %424 = dma.done [#allocation12], 512
        $region64: #{tpu_custom_call.1} parent=47 // pred_fallthru
          _
        // Predicated region
        $region65: #{tpu_custom_call.1} parent=47 // pred_check
          %p425 = pneg %p163
        $region66: #{tpu_custom_call.1} parent=47 // pred_check_branch
          %427 = sbr.rel (%p425) target = $region68
        $region67: #{tpu_custom_call.1} parent=47 // pred_region
          %428 = dma.done [#allocation12], 512
        $region68: #{tpu_custom_call.1} parent=47 // pred_fallthru
          _
        // Predicated region
        $region69: #{tpu_custom_call.1} parent=47 // pred_check
          %p429 = pneg %p184
        $region70: #{tpu_custom_call.1} parent=47 // pred_check_branch
          %431 = sbr.rel (%p429) target = $region72
        $region71: #{tpu_custom_call.1} parent=47 // pred_region
          %432 = dma.done [#allocation15], 512
        $region72: #{tpu_custom_call.1} parent=47 // pred_fallthru
          _
        // Predicated region
        $region73: #{tpu_custom_call.1} parent=47 // pred_check
          %p433 = pneg %p205
        $region74: #{tpu_custom_call.1} parent=47 // pred_check_branch
          %435 = sbr.rel (%p433) target = $region76
        $region75: #{tpu_custom_call.1} parent=47 // pred_region
          %436 = dma.done [#allocation15], 512
        $region76: #{tpu_custom_call.1} parent=47 // pred_fallthru
          _
        %s437 = sand.u32 %s56, 1
        %s438 = scalar_lea.sflag [#allocation6], %s437
        %s439 = sand.u32 %s56, 1
        %s440 = smul.addr %s439, 8
        %s441 = scalar_lea.vmem [#allocation5], %s440
        %p442 = pneg %p69
        %p443 = pneg %p66
        %s444 = sand.u32 %s34, 1
        %s445 = scalar_lea.sflag [#allocation9], %s444
        %s446 = sand.u32 %s82, 1
        %s447 = smul.addr %s446, 8
        %s448 = scalar_lea.vmem [#allocation8], %s447
        %p449 = pneg %p95
        %p450 = pneg %p92
        %s451 = sand.u32 %s34, 1
        %s452 = scalar_lea.sflag [#allocation9], %s451
        %s453 = sand.u32 %s108, 1
        %s454 = smul.addr %s453, 8
        %s455 = scalar_lea.vmem [#allocation10], %s454
        %p456 = pneg %p121
        %p457 = pneg %p118
        %p458 = pneg %p142
        %p459 = pneg %p139
        %p460 = pneg %p163
        %p461 = pneg %p160
        %p462 = pneg %p184
        %p463 = pneg %p181
        %p464 = pneg %p205
        %p465 = pneg %p202
        %p466 = pneg %p233
        %p467 = pneg %p230
        %s468 = sand.u32 %s220, 1
        %s469 = scalar_lea.sflag [#allocation7], %s468
        %s470 = sand.u32 %s220, 1
        %s471 = smul.addr %s470, 8
        %s472 = scalar_lea.vmem [#allocation17], %s471
        %p473 = pneg %p261
        %p474 = pneg %p258
        %s475 = sand.u32 %s248, 1
        %s476 = scalar_lea.sflag [#allocation19], %s475
        %s477 = sand.u32 %s248, 1
        %s478 = smul.addr %s477, 32
        %s479 = scalar_lea.vmem [#allocation18], %s478
        %p480 = scmp.eq.s32.totalorder %s39, 0
        // Predicated region
        $region77: #{tpu_custom_call.1} parent=47 // pred_check
          %p481 = pneg %p480
        $region78: #{tpu_custom_call.1} parent=47 // pred_check_branch
          %483 = sbr.rel (%p481) target = $region80
        $region79: #{tpu_custom_call.1} parent=47 // pred_region
          %v484 = vld [vmem:[%s407] sm:$0xff]
          %v485 = vld [vmem:[#allocation13] sm:$0xff]
          %v486 = vld [vmem:[#allocation13 + $0x8] sm:$0xff]
          %v487 = vld [vmem:[#allocation13 + $0x10] sm:$0xff]
          %v488 = vld [vmem:[#allocation13 + $0x18] sm:$0xff]
          %vm489 = vcmask 261120
          %v491 = vsel %vm489, %v484, 0
          %493 = vmatprep.subr.mxu0 0.0
          %494 = vmatpush1.msra.mxu0 %v485
          %495 = vmatprep.subr.mxu0 0.0
          %496 = vmatpush1.msra.mxu0 %v486
          %497 = vmatprep.subr.mxu0 0.0
          %498 = vmatpush1.msra.mxu0 %v487
          %499 = vmatprep.subr.mxu0 0.0
          %500 = vmatpush1.msra.mxu0 %v488
          %501 = vmatprep.subr.mxu0 0.0
          %502 = vmatpush1.msra.mxu0 0.0
          %503 = vmatprep.subr.mxu0 0.0
          %504 = vmatpush1.msra.mxu0 0.0
          %505 = vmatprep.subr.mxu0 0.0
          %506 = vmatpush1.msra.mxu0 0.0
          %507 = vmatprep.subr.mxu0 0.0
          %508 = vmatpush1.msra.mxu0 0.0
          %509 = vmatprep.subr.mxu0 0.0
          %510 = vmatpush1.msra.mxu0 0.0
          %511 = vmatprep.subr.mxu0 0.0
          %512 = vmatpush1.msra.mxu0 0.0
          %513 = vmatprep.subr.mxu0 0.0
          %514 = vmatpush1.msra.mxu0 0.0
          %515 = vmatprep.subr.mxu0 0.0
          %516 = vmatpush1.msra.mxu0 0.0
          %517 = vmatprep.subr.mxu0 0.0
          %518 = vmatpush1.msra.mxu0 0.0
          %519 = vmatprep.subr.mxu0 0.0
          %520 = vmatpush1.msra.mxu0 0.0
          %521 = vmatprep.subr.mxu0 0.0
          %522 = vmatpush1.msra.mxu0 0.0
          %523 = vmatprep.subr.mxu0 0.0
          %524 = vmatpush1.msra.mxu0 0.0
          %525 = vmatprep.subr.mxu0 0.0
          %526 = vmatpush1.msra.mxu0 0.0
          %527 = vmatprep.subr.mxu0 0.0
          %528 = vmatpush1.msra.mxu0 0.0
          %529 = vmatprep.subr.mxu0 0.0
          %530 = vmatpush1.msra.mxu0 0.0
          %531 = vmatprep.subr.mxu0 0.0
          %532 = vmatpush1.msra.mxu0 0.0
          %533 = vmatprep.subr.mxu0 0.0
          %534 = vmatpush1.msra.mxu0 0.0
          %535 = vmatprep.subr.mxu0 0.0
          %536 = vmatpush1.msra.mxu0 0.0
          %537 = vmatprep.subr.mxu0 0.0
          %538 = vmatpush1.msra.mxu0 0.0
          %539 = vmatprep.subr.mxu0 0.0
          %540 = vmatpush1.msra.mxu0 0.0
          %541 = vmatprep.subr.mxu0 0.0
          %542 = vmatpush1.msra.mxu0 0.0
          %543 = vmatprep.subr.mxu0 0.0
          %544 = vmatpush1.msra.mxu0 0.0
          %545 = vmatprep.subr.mxu0 0.0
          %546 = vmatpush1.msra.mxu0 0.0
          %547 = vmatprep.subr.mxu0 0.0
          %548 = vmatpush1.msra.mxu0 0.0
          %549 = vmatprep.subr.mxu0 0.0
          %550 = vmatpush1.msra.mxu0 0.0
          %551 = vmatprep.subr.mxu0 0.0
          %552 = vmatpush1.msra.mxu0 0.0
          %553 = vmatprep.subr.mxu0 0.0
          %554 = vmatpush1.msra.mxu0 0.0
          %555 = vmatprep.subr.mxu0 0.0
          %556 = vmatpush1.msra.mxu0 0.0
          %557 = vmatprep.mubr.f32.mxu0 0.0
          %558 = vmatmul.mubr.f32.gmra.mrb[0].mxu0 %v491
          %v559 = vpop.f32.mrb[0].mxu0
          %v560 = vadd.f32 0.0, %v559
          %v561 = vpop.f32.mrb[0].mxu0
          %562 = vdwg.mxu0
          %563 = vst.msk [vmem:[#allocation2] sm:$0xff] %vm489, %v560
          %v564 = vld [vmem:[%s416] sm:$0xff]
          %v565 = vld [vmem:[#allocation14] sm:$0xff]
          %v566 = vld [vmem:[#allocation14 + $0x8] sm:$0xff]
          %v567 = vld [vmem:[#allocation14 + $0x10] sm:$0xff]
          %v568 = vld [vmem:[#allocation14 + $0x18] sm:$0xff]
          %v570 = vsel %vm489, %v564, 0
          %572 = vmatprep.subr.mxu0 0.0
          %573 = vmatpush1.msra.mxu0 %v565
          %574 = vmatprep.subr.mxu0 0.0
          %575 = vmatpush1.msra.mxu0 %v566
          %576 = vmatprep.subr.mxu0 0.0
          %577 = vmatpush1.msra.mxu0 %v567
          %578 = vmatprep.subr.mxu0 0.0
          %579 = vmatpush1.msra.mxu0 %v568
          %580 = vmatprep.subr.mxu0 0.0
          %581 = vmatpush1.msra.mxu0 0.0
          %582 = vmatprep.subr.mxu0 0.0
          %583 = vmatpush1.msra.mxu0 0.0
          %584 = vmatprep.subr.mxu0 0.0
          %585 = vmatpush1.msra.mxu0 0.0
          %586 = vmatprep.subr.mxu0 0.0
          %587 = vmatpush1.msra.mxu0 0.0
          %588 = vmatprep.subr.mxu0 0.0
          %589 = vmatpush1.msra.mxu0 0.0
          %590 = vmatprep.subr.mxu0 0.0
          %591 = vmatpush1.msra.mxu0 0.0
          %592 = vmatprep.subr.mxu0 0.0
          %593 = vmatpush1.msra.mxu0 0.0
          %594 = vmatprep.subr.mxu0 0.0
          %595 = vmatpush1.msra.mxu0 0.0
          %596 = vmatprep.subr.mxu0 0.0
          %597 = vmatpush1.msra.mxu0 0.0
          %598 = vmatprep.subr.mxu0 0.0
          %599 = vmatpush1.msra.mxu0 0.0
          %600 = vmatprep.subr.mxu0 0.0
          %601 = vmatpush1.msra.mxu0 0.0
          %602 = vmatprep.subr.mxu0 0.0
          %603 = vmatpush1.msra.mxu0 0.0
          %604 = vmatprep.subr.mxu0 0.0
          %605 = vmatpush1.msra.mxu0 0.0
          %606 = vmatprep.subr.mxu0 0.0
          %607 = vmatpush1.msra.mxu0 0.0
          %608 = vmatprep.subr.mxu0 0.0
          %609 = vmatpush1.msra.mxu0 0.0
          %610 = vmatprep.subr.mxu0 0.0
          %611 = vmatpush1.msra.mxu0 0.0
          %612 = vmatprep.subr.mxu0 0.0
          %613 = vmatpush1.msra.mxu0 0.0
          %614 = vmatprep.subr.mxu0 0.0
          %615 = vmatpush1.msra.mxu0 0.0
          %616 = vmatprep.subr.mxu0 0.0
          %617 = vmatpush1.msra.mxu0 0.0
          %618 = vmatprep.subr.mxu0 0.0
          %619 = vmatpush1.msra.mxu0 0.0
          %620 = vmatprep.subr.mxu0 0.0
          %621 = vmatpush1.msra.mxu0 0.0
          %622 = vmatprep.subr.mxu0 0.0
          %623 = vmatpush1.msra.mxu0 0.0
          %624 = vmatprep.subr.mxu0 0.0
          %625 = vmatpush1.msra.mxu0 0.0
          %626 = vmatprep.subr.mxu0 0.0
          %627 = vmatpush1.msra.mxu0 0.0
          %628 = vmatprep.subr.mxu0 0.0
          %629 = vmatpush1.msra.mxu0 0.0
          %630 = vmatprep.subr.mxu0 0.0
          %631 = vmatpush1.msra.mxu0 0.0
          %632 = vmatprep.subr.mxu0 0.0
          %633 = vmatpush1.msra.mxu0 0.0
          %634 = vmatprep.subr.mxu0 0.0
          %635 = vmatpush1.msra.mxu0 0.0
          %636 = vmatprep.mubr.f32.mxu0 0.0
          %637 = vmatmul.mubr.f32.gmra.mrb[0].mxu0 %v570
          %v638 = vpop.f32.mrb[0].mxu0
          %v639 = vadd.f32 0.0, %v638
          %v640 = vpop.f32.mrb[0].mxu0
          %641 = vdwg.mxu0
          %642 = vst.msk [vmem:[#allocation3] sm:$0xff] %vm489, %v639
        $region80: #{tpu_custom_call.1} parent=47 // pred_fallthru
          _
        %v643 = vld [vmem:[%s398] sm:$0xff]
        %v644 = vld [vmem:[#allocation11] sm:$0xff]
        %v645 = vld [vmem:[#allocation11 + $0x8] sm:$0xff]
        %v646 = vld [vmem:[#allocation11 + $0x10] sm:$0xff]
        %v647 = vld [vmem:[#allocation11 + $0x18] sm:$0xff]
        %vm648 = vcmask 261120
        %v650 = vsel %vm648, %v643, 0
        %652 = vmatprep.subr.mxu0 0.0
        %653 = vmatpush1.msra.mxu0 %v644
        %654 = vmatprep.subr.mxu0 0.0
        %655 = vmatpush1.msra.mxu0 %v645
        %656 = vmatprep.subr.mxu0 0.0
        %657 = vmatpush1.msra.mxu0 %v646
        %658 = vmatprep.subr.mxu0 0.0
        %659 = vmatpush1.msra.mxu0 %v647
        %660 = vmatprep.subr.mxu0 0.0
        %661 = vmatpush1.msra.mxu0 0.0
        %662 = vmatprep.subr.mxu0 0.0
        %663 = vmatpush1.msra.mxu0 0.0
        %664 = vmatprep.subr.mxu0 0.0
        %665 = vmatpush1.msra.mxu0 0.0
        %666 = vmatprep.subr.mxu0 0.0
        %667 = vmatpush1.msra.mxu0 0.0
        %668 = vmatprep.subr.mxu0 0.0
        %669 = vmatpush1.msra.mxu0 0.0
        %670 = vmatprep.subr.mxu0 0.0
        %671 = vmatpush1.msra.mxu0 0.0
        %672 = vmatprep.subr.mxu0 0.0
        %673 = vmatpush1.msra.mxu0 0.0
        %674 = vmatprep.subr.mxu0 0.0
        %675 = vmatpush1.msra.mxu0 0.0
        %676 = vmatprep.subr.mxu0 0.0
        %677 = vmatpush1.msra.mxu0 0.0
        %678 = vmatprep.subr.mxu0 0.0
        %679 = vmatpush1.msra.mxu0 0.0
        %680 = vmatprep.subr.mxu0 0.0
        %681 = vmatpush1.msra.mxu0 0.0
        %682 = vmatprep.subr.mxu0 0.0
        %683 = vmatpush1.msra.mxu0 0.0
        %684 = vmatprep.subr.mxu0 0.0
        %685 = vmatpush1.msra.mxu0 0.0
        %686 = vmatprep.subr.mxu0 0.0
        %687 = vmatpush1.msra.mxu0 0.0
        %688 = vmatprep.subr.mxu0 0.0
        %689 = vmatpush1.msra.mxu0 0.0
        %690 = vmatprep.subr.mxu0 0.0
        %691 = vmatpush1.msra.mxu0 0.0
        %692 = vmatprep.subr.mxu0 0.0
        %693 = vmatpush1.msra.mxu0 0.0
        %694 = vmatprep.subr.mxu0 0.0
        %695 = vmatpush1.msra.mxu0 0.0
        %696 = vmatprep.subr.mxu0 0.0
        %697 = vmatpush1.msra.mxu0 0.0
        %698 = vmatprep.subr.mxu0 0.0
        %699 = vmatpush1.msra.mxu0 0.0
        %700 = vmatprep.subr.mxu0 0.0
        %701 = vmatpush1.msra.mxu0 0.0
        %702 = vmatprep.subr.mxu0 0.0
        %703 = vmatpush1.msra.mxu0 0.0
        %704 = vmatprep.subr.mxu0 0.0
        %705 = vmatpush1.msra.mxu0 0.0
        %706 = vmatprep.subr.mxu0 0.0
        %707 = vmatpush1.msra.mxu0 0.0
        %708 = vmatprep.subr.mxu0 0.0
        %709 = vmatpush1.msra.mxu0 0.0
        %710 = vmatprep.subr.mxu0 0.0
        %711 = vmatpush1.msra.mxu0 0.0
        %712 = vmatprep.subr.mxu0 0.0
        %713 = vmatpush1.msra.mxu0 0.0
        %714 = vmatprep.subr.mxu0 0.0
        %715 = vmatpush1.msra.mxu0 0.0
        %716 = vmatprep.mubr.f32.mxu0 0.0
        %717 = vmatmul.mubr.f32.gmra.mrb[0].mxu0 %v650
        %v718 = vpop.f32.mrb[0].mxu0
        %v719 = vadd.f32 0.0, %v718
        %v720 = vpop.f32.mrb[0].mxu0
        %721 = vdwg.mxu0
        %v722 = vmul.f32 %v719, 0.35355338
        %v723 = vld [vmem:[#allocation2] sm:$0xff]
        %v724 = vld [vmem:[#allocation3] sm:$0xff]
        %vm725 = vcmask 64512
        %v727 = vsel %vm725, %v722, 0
        %v730 = vsel %vm725, %v723, 0
        %732 = vmatprep.subr.mxu0 0.0
        %733 = vmatpush1.xpose.msra.mxu0 %v730
        %734 = vmatprep.subr.mxu0 0.0
        %735 = vmatpush1.xpose.msra.mxu0 0.0
        %736 = vmatprep.subr.mxu0 0.0
        %737 = vmatpush1.xpose.msra.mxu0 0.0
        %738 = vmatprep.subr.mxu0 0.0
        %739 = vmatpush1.xpose.msra.mxu0 0.0
        %740 = vmatprep.subr.mxu0 0.0
        %741 = vmatpush1.xpose.msra.mxu0 0.0
        %742 = vmatprep.subr.mxu0 0.0
        %743 = vmatpush1.xpose.msra.mxu0 0.0
        %744 = vmatprep.subr.mxu0 0.0
        %745 = vmatpush1.xpose.msra.mxu0 0.0
        %746 = vmatprep.subr.mxu0 0.0
        %747 = vmatpush1.xpose.msra.mxu0 0.0
        %748 = vmatprep.subr.mxu0 0.0
        %749 = vmatpush1.xpose.msra.mxu0 0.0
        %750 = vmatprep.subr.mxu0 0.0
        %751 = vmatpush1.xpose.msra.mxu0 0.0
        %752 = vmatprep.subr.mxu0 0.0
        %753 = vmatpush1.xpose.msra.mxu0 0.0
        %754 = vmatprep.subr.mxu0 0.0
        %755 = vmatpush1.xpose.msra.mxu0 0.0
        %756 = vmatprep.subr.mxu0 0.0
        %757 = vmatpush1.xpose.msra.mxu0 0.0
        %758 = vmatprep.subr.mxu0 0.0
        %759 = vmatpush1.xpose.msra.mxu0 0.0
        %760 = vmatprep.subr.mxu0 0.0
        %761 = vmatpush1.xpose.msra.mxu0 0.0
        %762 = vmatprep.subr.mxu0 0.0
        %763 = vmatpush1.xpose.msra.mxu0 0.0
        %764 = vmatprep.subr.mxu0 0.0
        %765 = vmatpush1.xpose.msra.mxu0 0.0
        %766 = vmatprep.subr.mxu0 0.0
        %767 = vmatpush1.xpose.msra.mxu0 0.0
        %768 = vmatprep.subr.mxu0 0.0
        %769 = vmatpush1.xpose.msra.mxu0 0.0
        %770 = vmatprep.subr.mxu0 0.0
        %771 = vmatpush1.xpose.msra.mxu0 0.0
        %772 = vmatprep.subr.mxu0 0.0
        %773 = vmatpush1.xpose.msra.mxu0 0.0
        %774 = vmatprep.subr.mxu0 0.0
        %775 = vmatpush1.xpose.msra.mxu0 0.0
        %776 = vmatprep.subr.mxu0 0.0
        %777 = vmatpush1.xpose.msra.mxu0 0.0
        %778 = vmatprep.subr.mxu0 0.0
        %779 = vmatpush1.xpose.msra.mxu0 0.0
        %780 = vmatprep.subr.mxu0 0.0
        %781 = vmatpush1.xpose.msra.mxu0 0.0
        %782 = vmatprep.subr.mxu0 0.0
        %783 = vmatpush1.xpose.msra.mxu0 0.0
        %784 = vmatprep.subr.mxu0 0.0
        %785 = vmatpush1.xpose.msra.mxu0 0.0
        %786 = vmatprep.subr.mxu0 0.0
        %787 = vmatpush1.xpose.msra.mxu0 0.0
        %788 = vmatprep.subr.mxu0 0.0
        %789 = vmatpush1.xpose.msra.mxu0 0.0
        %790 = vmatprep.subr.mxu0 0.0
        %791 = vmatpush1.xpose.msra.mxu0 0.0
        %792 = vmatprep.subr.mxu0 0.0
        %793 = vmatpush1.xpose.msra.mxu0 0.0
        %794 = vmatprep.subr.mxu0 0.0
        %795 = vmatpush1.xpose.msra.mxu0 0.0
        %796 = vmatprep.mubr.f32.mxu0 0.0
        %797 = vmatmul.mubr.f32.gmra.mrb[0].mxu0 %v727
        %v798 = vpop.f32.mrb[0].mxu0
        %v799 = vadd.f32 0.0, %v798
        %v800 = vpop.f32.mrb[0].mxu0
        %801 = vdwg.mxu0
        %v802 = vsel %vm725, %v799, -inf
        %803 = vmax.xlane.f32.xlu0 %v802
        %v804 = vpop.xlane.xlu0 %803
        %v805 = vsub.f32 %v799, %v804
        %v806 = vmul.f32 %v805, 1.442695
        %v807 = vpow.pop %v806
        %v808 = vsel %vm725, %v807, 0.0
        %809 = vadd.xlane.f32.xlu0 %v808
        %v810 = vpop.xlane.xlu0 %809
        %v811 = vrcp.pop %v810
        %v812 = vmul.f32 %v807, %v811
        %813 = vst.msk [vmem:[%s479] sm:$0xff] %vm725, %v812
        %v815 = vsel %vm725, %v812, 0
        %817 = vmatprep.subr.mxu0 0.0
        %818 = vmatpush1.msra.mxu0 %v724
        %819 = vmatprep.subr.mxu0 0.0
        %820 = vmatpush1.msra.mxu0 0.0
        %821 = vmatprep.subr.mxu0 0.0
        %822 = vmatpush1.msra.mxu0 0.0
        %823 = vmatprep.subr.mxu0 0.0
        %824 = vmatpush1.msra.mxu0 0.0
        %825 = vmatprep.subr.mxu0 0.0
        %826 = vmatpush1.msra.mxu0 0.0
        %827 = vmatprep.subr.mxu0 0.0
        %828 = vmatpush1.msra.mxu0 0.0
        %829 = vmatprep.subr.mxu0 0.0
        %830 = vmatpush1.msra.mxu0 0.0
        %831 = vmatprep.subr.mxu0 0.0
        %832 = vmatpush1.msra.mxu0 0.0
        %833 = vmatprep.subr.mxu0 0.0
        %834 = vmatpush1.msra.mxu0 0.0
        %835 = vmatprep.subr.mxu0 0.0
        %836 = vmatpush1.msra.mxu0 0.0
        %837 = vmatprep.subr.mxu0 0.0
        %838 = vmatpush1.msra.mxu0 0.0
        %839 = vmatprep.subr.mxu0 0.0
        %840 = vmatpush1.msra.mxu0 0.0
        %841 = vmatprep.subr.mxu0 0.0
        %842 = vmatpush1.msra.mxu0 0.0
        %843 = vmatprep.subr.mxu0 0.0
        %844 = vmatpush1.msra.mxu0 0.0
        %845 = vmatprep.subr.mxu0 0.0
        %846 = vmatpush1.msra.mxu0 0.0
        %847 = vmatprep.subr.mxu0 0.0
        %848 = vmatpush1.msra.mxu0 0.0
        %849 = vmatprep.subr.mxu0 0.0
        %850 = vmatpush1.msra.mxu0 0.0
        %851 = vmatprep.subr.mxu0 0.0
        %852 = vmatpush1.msra.mxu0 0.0
        %853 = vmatprep.subr.mxu0 0.0
        %854 = vmatpush1.msra.mxu0 0.0
        %855 = vmatprep.subr.mxu0 0.0
        %856 = vmatpush1.msra.mxu0 0.0
        %857 = vmatprep.subr.mxu0 0.0
        %858 = vmatpush1.msra.mxu0 0.0
        %859 = vmatprep.subr.mxu0 0.0
        %860 = vmatpush1.msra.mxu0 0.0
        %861 = vmatprep.subr.mxu0 0.0
        %862 = vmatpush1.msra.mxu0 0.0
        %863 = vmatprep.subr.mxu0 0.0
        %864 = vmatpush1.msra.mxu0 0.0
        %865 = vmatprep.subr.mxu0 0.0
        %866 = vmatpush1.msra.mxu0 0.0
        %867 = vmatprep.subr.mxu0 0.0
        %868 = vmatpush1.msra.mxu0 0.0
        %869 = vmatprep.subr.mxu0 0.0
        %870 = vmatpush1.msra.mxu0 0.0
        %871 = vmatprep.subr.mxu0 0.0
        %872 = vmatpush1.msra.mxu0 0.0
        %873 = vmatprep.subr.mxu0 0.0
        %874 = vmatpush1.msra.mxu0 0.0
        %875 = vmatprep.subr.mxu0 0.0
        %876 = vmatpush1.msra.mxu0 0.0
        %877 = vmatprep.subr.mxu0 0.0
        %878 = vmatpush1.msra.mxu0 0.0
        %879 = vmatprep.subr.mxu0 0.0
        %880 = vmatpush1.msra.mxu0 0.0
        %881 = vmatprep.mubr.f32.mxu0 0.0
        %882 = vmatmul.mubr.f32.gmra.mrb[0].mxu0 %v815
        %v883 = vpop.f32.mrb[0].mxu0
        %v884 = vadd.f32 0.0, %v883
        %v885 = vpop.f32.mrb[0].mxu0
        %886 = vdwg.mxu0
        %887 = vst.msk [vmem:[#allocation4] sm:$0xff] %vm725, %v884
        %v888 = vld [vmem:[#allocation2] sm:$0xff]
        %v889 = vld [vmem:[#allocation3] sm:$0xff]
        %890 = vrot.lane.b32.xlu0 %v722, 120
        %v891 = vpop.permute.xlu0 %890
        %893 = vrot.lane.b32.xlu0 %v888, 120
        %v894 = vpop.permute.xlu0 %893
        %v895 = vsel %vm725, %v891, 0
        %v897 = vsel %vm725, %v894, 0
        %899 = vmatprep.subr.mxu0 0.0
        %900 = vmatpush1.xpose.msra.mxu0 %v897
        %901 = vmatprep.subr.mxu0 0.0
        %902 = vmatpush1.xpose.msra.mxu0 0.0
        %903 = vmatprep.subr.mxu0 0.0
        %904 = vmatpush1.xpose.msra.mxu0 0.0
        %905 = vmatprep.subr.mxu0 0.0
        %906 = vmatpush1.xpose.msra.mxu0 0.0
        %907 = vmatprep.subr.mxu0 0.0
        %908 = vmatpush1.xpose.msra.mxu0 0.0
        %909 = vmatprep.subr.mxu0 0.0
        %910 = vmatpush1.xpose.msra.mxu0 0.0
        %911 = vmatprep.subr.mxu0 0.0
        %912 = vmatpush1.xpose.msra.mxu0 0.0
        %913 = vmatprep.subr.mxu0 0.0
        %914 = vmatpush1.xpose.msra.mxu0 0.0
        %915 = vmatprep.subr.mxu0 0.0
        %916 = vmatpush1.xpose.msra.mxu0 0.0
        %917 = vmatprep.subr.mxu0 0.0
        %918 = vmatpush1.xpose.msra.mxu0 0.0
        %919 = vmatprep.subr.mxu0 0.0
        %920 = vmatpush1.xpose.msra.mxu0 0.0
        %921 = vmatprep.subr.mxu0 0.0
        %922 = vmatpush1.xpose.msra.mxu0 0.0
        %923 = vmatprep.subr.mxu0 0.0
        %924 = vmatpush1.xpose.msra.mxu0 0.0
        %925 = vmatprep.subr.mxu0 0.0
        %926 = vmatpush1.xpose.msra.mxu0 0.0
        %927 = vmatprep.subr.mxu0 0.0
        %928 = vmatpush1.xpose.msra.mxu0 0.0
        %929 = vmatprep.subr.mxu0 0.0
        %930 = vmatpush1.xpose.msra.mxu0 0.0
        %931 = vmatprep.subr.mxu0 0.0
        %932 = vmatpush1.xpose.msra.mxu0 0.0
        %933 = vmatprep.subr.mxu0 0.0
        %934 = vmatpush1.xpose.msra.mxu0 0.0
        %935 = vmatprep.subr.mxu0 0.0
        %936 = vmatpush1.xpose.msra.mxu0 0.0
        %937 = vmatprep.subr.mxu0 0.0
        %938 = vmatpush1.xpose.msra.mxu0 0.0
        %939 = vmatprep.subr.mxu0 0.0
        %940 = vmatpush1.xpose.msra.mxu0 0.0
        %941 = vmatprep.subr.mxu0 0.0
        %942 = vmatpush1.xpose.msra.mxu0 0.0
        %943 = vmatprep.subr.mxu0 0.0
        %944 = vmatpush1.xpose.msra.mxu0 0.0
        %945 = vmatprep.subr.mxu0 0.0
        %946 = vmatpush1.xpose.msra.mxu0 0.0
        %947 = vmatprep.subr.mxu0 0.0
        %948 = vmatpush1.xpose.msra.mxu0 0.0
        %949 = vmatprep.subr.mxu0 0.0
        %950 = vmatpush1.xpose.msra.mxu0 0.0
        %951 = vmatprep.subr.mxu0 0.0
        %952 = vmatpush1.xpose.msra.mxu0 0.0
        %953 = vmatprep.subr.mxu0 0.0
        %954 = vmatpush1.xpose.msra.mxu0 0.0
        %955 = vmatprep.subr.mxu0 0.0
        %956 = vmatpush1.xpose.msra.mxu0 0.0
        %957 = vmatprep.subr.mxu0 0.0
        %958 = vmatpush1.xpose.msra.mxu0 0.0
        %959 = vmatprep.subr.mxu0 0.0
        %960 = vmatpush1.xpose.msra.mxu0 0.0
        %961 = vmatprep.subr.mxu0 0.0
        %962 = vmatpush1.xpose.msra.mxu0 0.0
        %963 = vmatprep.mubr.f32.mxu0 0.0
        %964 = vmatmul.mubr.f32.gmra.mrb[0].mxu0 %v895
        %v965 = vpop.f32.mrb[0].mxu0
        %v966 = vadd.f32 0.0, %v965
        %v967 = vpop.f32.mrb[0].mxu0
        %968 = vdwg.mxu0
        %v969 = vsel %vm725, %v966, -inf
        %970 = vmax.xlane.f32.xlu0 %v969
        %v971 = vpop.xlane.xlu0 %970
        %v972 = vsub.f32 %v966, %v971
        %v973 = vmul.f32 %v972, 1.442695
        %v974 = vpow.pop %v973
        %v975 = vsel %vm725, %v974, 0.0
        %976 = vadd.xlane.f32.xlu0 %v975
        %v977 = vpop.xlane.xlu0 %976
        %v978 = vrcp.pop %v977
        %v979 = vmul.f32 %v974, %v978
        %s980 = scalar_lea.vmem %s479, 8 [#allocation18]
        %981 = vst.msk [vmem:[%s980] sm:$0xff] %vm725, %v979
        %983 = vrot.lane.b32.xlu0 %v889, 120
        %v984 = vpop.permute.xlu0 %983
        %v987 = vsel %vm725, %v979, 0
        %989 = vmatprep.subr.mxu0 0.0
        %990 = vmatpush1.msra.mxu0 %v984
        %991 = vmatprep.subr.mxu0 0.0
        %992 = vmatpush1.msra.mxu0 0.0
        %993 = vmatprep.subr.mxu0 0.0
        %994 = vmatpush1.msra.mxu0 0.0
        %995 = vmatprep.subr.mxu0 0.0
        %996 = vmatpush1.msra.mxu0 0.0
        %997 = vmatprep.subr.mxu0 0.0
        %998 = vmatpush1.msra.mxu0 0.0
        %999 = vmatprep.subr.mxu0 0.0
        %1000 = vmatpush1.msra.mxu0 0.0
        %1001 = vmatprep.subr.mxu0 0.0
        %1002 = vmatpush1.msra.mxu0 0.0
        %1003 = vmatprep.subr.mxu0 0.0
        %1004 = vmatpush1.msra.mxu0 0.0
        %1005 = vmatprep.subr.mxu0 0.0
        %1006 = vmatpush1.msra.mxu0 0.0
        %1007 = vmatprep.subr.mxu0 0.0
        %1008 = vmatpush1.msra.mxu0 0.0
        %1009 = vmatprep.subr.mxu0 0.0
        %1010 = vmatpush1.msra.mxu0 0.0
        %1011 = vmatprep.subr.mxu0 0.0
        %1012 = vmatpush1.msra.mxu0 0.0
        %1013 = vmatprep.subr.mxu0 0.0
        %1014 = vmatpush1.msra.mxu0 0.0
        %1015 = vmatprep.subr.mxu0 0.0
        %1016 = vmatpush1.msra.mxu0 0.0
        %1017 = vmatprep.subr.mxu0 0.0
        %1018 = vmatpush1.msra.mxu0 0.0
        %1019 = vmatprep.subr.mxu0 0.0
        %1020 = vmatpush1.msra.mxu0 0.0
        %1021 = vmatprep.subr.mxu0 0.0
        %1022 = vmatpush1.msra.mxu0 0.0
        %1023 = vmatprep.subr.mxu0 0.0
        %1024 = vmatpush1.msra.mxu0 0.0
        %1025 = vmatprep.subr.mxu0 0.0
        %1026 = vmatpush1.msra.mxu0 0.0
        %1027 = vmatprep.subr.mxu0 0.0
        %1028 = vmatpush1.msra.mxu0 0.0
        %1029 = vmatprep.subr.mxu0 0.0
        %1030 = vmatpush1.msra.mxu0 0.0
        %1031 = vmatprep.subr.mxu0 0.0
        %1032 = vmatpush1.msra.mxu0 0.0
        %1033 = vmatprep.subr.mxu0 0.0
        %1034 = vmatpush1.msra.mxu0 0.0
        %1035 = vmatprep.subr.mxu0 0.0
        %1036 = vmatpush1.msra.mxu0 0.0
        %1037 = vmatprep.subr.mxu0 0.0
        %1038 = vmatpush1.msra.mxu0 0.0
        %1039 = vmatprep.subr.mxu0 0.0
        %1040 = vmatpush1.msra.mxu0 0.0
        %1041 = vmatprep.subr.mxu0 0.0
        %1042 = vmatpush1.msra.mxu0 0.0
        %1043 = vmatprep.subr.mxu0 0.0
        %1044 = vmatpush1.msra.mxu0 0.0
        %1045 = vmatprep.subr.mxu0 0.0
        %1046 = vmatpush1.msra.mxu0 0.0
        %1047 = vmatprep.subr.mxu0 0.0
        %1048 = vmatpush1.msra.mxu0 0.0
        %1049 = vmatprep.subr.mxu0 0.0
        %1050 = vmatpush1.msra.mxu0 0.0
        %1051 = vmatprep.subr.mxu0 0.0
        %1052 = vmatpush1.msra.mxu0 0.0
        %1053 = vmatprep.mubr.f32.mxu0 0.0
        %1054 = vmatmul.mubr.f32.gmra.mrb[0].mxu0 %v987
        %v1055 = vpop.f32.mrb[0].mxu0
        %v1056 = vadd.f32 0.0, %v1055
        %v1057 = vpop.f32.mrb[0].mxu0
        %1058 = vdwg.mxu0
        %1060 = vrot.lane.b32.xlu0 %v1056, 8
        %v1061 = vpop.permute.xlu0 %1060
        %vm1063 = vcmask 130112
        %1064 = vst.msk [vmem:[#allocation4] sm:$0xff] %vm1063, %v1061
        %v1065 = vld [vmem:[#allocation2] sm:$0xff]
        %v1066 = vld [vmem:[#allocation3] sm:$0xff]
        %1067 = vrot.lane.b32.xlu0 %v722, 112
        %v1068 = vpop.permute.xlu0 %1067
        %1070 = vrot.lane.b32.xlu0 %v1065, 112
        %v1071 = vpop.permute.xlu0 %1070
        %v1072 = vsel %vm725, %v1068, 0
        %v1074 = vsel %vm725, %v1071, 0
        %1076 = vmatprep.subr.mxu0 0.0
        %1077 = vmatpush1.xpose.msra.mxu0 %v1074
        %1078 = vmatprep.subr.mxu0 0.0
        %1079 = vmatpush1.xpose.msra.mxu0 0.0
        %1080 = vmatprep.subr.mxu0 0.0
        %1081 = vmatpush1.xpose.msra.mxu0 0.0
        %1082 = vmatprep.subr.mxu0 0.0
        %1083 = vmatpush1.xpose.msra.mxu0 0.0
        %1084 = vmatprep.subr.mxu0 0.0
        %1085 = vmatpush1.xpose.msra.mxu0 0.0
        %1086 = vmatprep.subr.mxu0 0.0
        %1087 = vmatpush1.xpose.msra.mxu0 0.0
        %1088 = vmatprep.subr.mxu0 0.0
        %1089 = vmatpush1.xpose.msra.mxu0 0.0
        %1090 = vmatprep.subr.mxu0 0.0
        %1091 = vmatpush1.xpose.msra.mxu0 0.0
        %1092 = vmatprep.subr.mxu0 0.0
        %1093 = vmatpush1.xpose.msra.mxu0 0.0
        %1094 = vmatprep.subr.mxu0 0.0
        %1095 = vmatpush1.xpose.msra.mxu0 0.0
        %1096 = vmatprep.subr.mxu0 0.0
        %1097 = vmatpush1.xpose.msra.mxu0 0.0
        %1098 = vmatprep.subr.mxu0 0.0
        %1099 = vmatpush1.xpose.msra.mxu0 0.0
        %1100 = vmatprep.subr.mxu0 0.0
        %1101 = vmatpush1.xpose.msra.mxu0 0.0
        %1102 = vmatprep.subr.mxu0 0.0
        %1103 = vmatpush1.xpose.msra.mxu0 0.0
        %1104 = vmatprep.subr.mxu0 0.0
        %1105 = vmatpush1.xpose.msra.mxu0 0.0
        %1106 = vmatprep.subr.mxu0 0.0
        %1107 = vmatpush1.xpose.msra.mxu0 0.0
        %1108 = vmatprep.subr.mxu0 0.0
        %1109 = vmatpush1.xpose.msra.mxu0 0.0
        %1110 = vmatprep.subr.mxu0 0.0
        %1111 = vmatpush1.xpose.msra.mxu0 0.0
        %1112 = vmatprep.subr.mxu0 0.0
        %1113 = vmatpush1.xpose.msra.mxu0 0.0
        %1114 = vmatprep.subr.mxu0 0.0
        %1115 = vmatpush1.xpose.msra.mxu0 0.0
        %1116 = vmatprep.subr.mxu0 0.0
        %1117 = vmatpush1.xpose.msra.mxu0 0.0
        %1118 = vmatprep.subr.mxu0 0.0
        %1119 = vmatpush1.xpose.msra.mxu0 0.0
        %1120 = vmatprep.subr.mxu0 0.0
        %1121 = vmatpush1.xpose.msra.mxu0 0.0
        %1122 = vmatprep.subr.mxu0 0.0
        %1123 = vmatpush1.xpose.msra.mxu0 0.0
        %1124 = vmatprep.subr.mxu0 0.0
        %1125 = vmatpush1.xpose.msra.mxu0 0.0
        %1126 = vmatprep.subr.mxu0 0.0
        %1127 = vmatpush1.xpose.msra.mxu0 0.0
        %1128 = vmatprep.subr.mxu0 0.0
        %1129 = vmatpush1.xpose.msra.mxu0 0.0
        %1130 = vmatprep.subr.mxu0 0.0
        %1131 = vmatpush1.xpose.msra.mxu0 0.0
        %1132 = vmatprep.subr.mxu0 0.0
        %1133 = vmatpush1.xpose.msra.mxu0 0.0
        %1134 = vmatprep.subr.mxu0 0.0
        %1135 = vmatpush1.xpose.msra.mxu0 0.0
        %1136 = vmatprep.subr.mxu0 0.0
        %1137 = vmatpush1.xpose.msra.mxu0 0.0
        %1138 = vmatprep.subr.mxu0 0.0
        %1139 = vmatpush1.xpose.msra.mxu0 0.0
        %1140 = vmatprep.mubr.f32.mxu0 0.0
        %1141 = vmatmul.mubr.f32.gmra.mrb[0].mxu0 %v1072
        %v1142 = vpop.f32.mrb[0].mxu0
        %v1143 = vadd.f32 0.0, %v1142
        %v1144 = vpop.f32.mrb[0].mxu0
        %1145 = vdwg.mxu0
        %v1146 = vsel %vm725, %v1143, -inf
        %1147 = vmax.xlane.f32.xlu0 %v1146
        %v1148 = vpop.xlane.xlu0 %1147
        %v1149 = vsub.f32 %v1143, %v1148
        %v1150 = vmul.f32 %v1149, 1.442695
        %v1151 = vpow.pop %v1150
        %v1152 = vsel %vm725, %v1151, 0.0
        %1153 = vadd.xlane.f32.xlu0 %v1152
        %v1154 = vpop.xlane.xlu0 %1153
        %v1155 = vrcp.pop %v1154
        %v1156 = vmul.f32 %v1151, %v1155
        %s1157 = scalar_lea.vmem %s479, 16 [#allocation18]
        %1158 = vst.msk [vmem:[%s1157] sm:$0xff] %vm725, %v1156
        %1160 = vrot.lane.b32.xlu0 %v1066, 112
        %v1161 = vpop.permute.xlu0 %1160
        %v1164 = vsel %vm725, %v1156, 0
        %1166 = vmatprep.subr.mxu0 0.0
        %1167 = vmatpush1.msra.mxu0 %v1161
        %1168 = vmatprep.subr.mxu0 0.0
        %1169 = vmatpush1.msra.mxu0 0.0
        %1170 = vmatprep.subr.mxu0 0.0
        %1171 = vmatpush1.msra.mxu0 0.0
        %1172 = vmatprep.subr.mxu0 0.0
        %1173 = vmatpush1.msra.mxu0 0.0
        %1174 = vmatprep.subr.mxu0 0.0
        %1175 = vmatpush1.msra.mxu0 0.0
        %1176 = vmatprep.subr.mxu0 0.0
        %1177 = vmatpush1.msra.mxu0 0.0
        %1178 = vmatprep.subr.mxu0 0.0
        %1179 = vmatpush1.msra.mxu0 0.0
        %1180 = vmatprep.subr.mxu0 0.0
        %1181 = vmatpush1.msra.mxu0 0.0
        %1182 = vmatprep.subr.mxu0 0.0
        %1183 = vmatpush1.msra.mxu0 0.0
        %1184 = vmatprep.subr.mxu0 0.0
        %1185 = vmatpush1.msra.mxu0 0.0
        %1186 = vmatprep.subr.mxu0 0.0
        %1187 = vmatpush1.msra.mxu0 0.0
        %1188 = vmatprep.subr.mxu0 0.0
        %1189 = vmatpush1.msra.mxu0 0.0
        %1190 = vmatprep.subr.mxu0 0.0
        %1191 = vmatpush1.msra.mxu0 0.0
        %1192 = vmatprep.subr.mxu0 0.0
        %1193 = vmatpush1.msra.mxu0 0.0
        %1194 = vmatprep.subr.mxu0 0.0
        %1195 = vmatpush1.msra.mxu0 0.0
        %1196 = vmatprep.subr.mxu0 0.0
        %1197 = vmatpush1.msra.mxu0 0.0
        %1198 = vmatprep.subr.mxu0 0.0
        %1199 = vmatpush1.msra.mxu0 0.0
        %1200 = vmatprep.subr.mxu0 0.0
        %1201 = vmatpush1.msra.mxu0 0.0
        %1202 = vmatprep.subr.mxu0 0.0
        %1203 = vmatpush1.msra.mxu0 0.0
        %1204 = vmatprep.subr.mxu0 0.0
        %1205 = vmatpush1.msra.mxu0 0.0
        %1206 = vmatprep.subr.mxu0 0.0
        %1207 = vmatpush1.msra.mxu0 0.0
        %1208 = vmatprep.subr.mxu0 0.0
        %1209 = vmatpush1.msra.mxu0 0.0
        %1210 = vmatprep.subr.mxu0 0.0
        %1211 = vmatpush1.msra.mxu0 0.0
        %1212 = vmatprep.subr.mxu0 0.0
        %1213 = vmatpush1.msra.mxu0 0.0
        %1214 = vmatprep.subr.mxu0 0.0
        %1215 = vmatpush1.msra.mxu0 0.0
        %1216 = vmatprep.subr.mxu0 0.0
        %1217 = vmatpush1.msra.mxu0 0.0
        %1218 = vmatprep.subr.mxu0 0.0
        %1219 = vmatpush1.msra.mxu0 0.0
        %1220 = vmatprep.subr.mxu0 0.0
        %1221 = vmatpush1.msra.mxu0 0.0
        %1222 = vmatprep.subr.mxu0 0.0
        %1223 = vmatpush1.msra.mxu0 0.0
        %1224 = vmatprep.subr.mxu0 0.0
        %1225 = vmatpush1.msra.mxu0 0.0
        %1226 = vmatprep.subr.mxu0 0.0
        %1227 = vmatpush1.msra.mxu0 0.0
        %1228 = vmatprep.subr.mxu0 0.0
        %1229 = vmatpush1.msra.mxu0 0.0
        %1230 = vmatprep.mubr.f32.mxu0 0.0
        %1231 = vmatmul.mubr.f32.gmra.mrb[0].mxu0 %v1164
        %v1232 = vpop.f32.mrb[0].mxu0
        %v1233 = vadd.f32 0.0, %v1232
        %v1234 = vpop.f32.mrb[0].mxu0
        %1235 = vdwg.mxu0
        %1237 = vrot.lane.b32.xlu0 %v1233, 16
        %v1238 = vpop.permute.xlu0 %1237
        %vm1240 = vcmask 195712
        %1241 = vst.msk [vmem:[#allocation4] sm:$0xff] %vm1240, %v1238
        %v1242 = vld [vmem:[#allocation2] sm:$0xff]
        %v1243 = vld [vmem:[#allocation3] sm:$0xff]
        %1244 = vrot.lane.b32.xlu0 %v722, 104
        %v1245 = vpop.permute.xlu0 %1244
        %1247 = vrot.lane.b32.xlu0 %v1242, 104
        %v1248 = vpop.permute.xlu0 %1247
        %v1249 = vsel %vm725, %v1245, 0
        %v1251 = vsel %vm725, %v1248, 0
        %1253 = vmatprep.subr.mxu0 0.0
        %1254 = vmatpush1.xpose.msra.mxu0 %v1251
        %1255 = vmatprep.subr.mxu0 0.0
        %1256 = vmatpush1.xpose.msra.mxu0 0.0
        %1257 = vmatprep.subr.mxu0 0.0
        %1258 = vmatpush1.xpose.msra.mxu0 0.0
        %1259 = vmatprep.subr.mxu0 0.0
        %1260 = vmatpush1.xpose.msra.mxu0 0.0
        %1261 = vmatprep.subr.mxu0 0.0
        %1262 = vmatpush1.xpose.msra.mxu0 0.0
        %1263 = vmatprep.subr.mxu0 0.0
        %1264 = vmatpush1.xpose.msra.mxu0 0.0
        %1265 = vmatprep.subr.mxu0 0.0
        %1266 = vmatpush1.xpose.msra.mxu0 0.0
        %1267 = vmatprep.subr.mxu0 0.0
        %1268 = vmatpush1.xpose.msra.mxu0 0.0
        %1269 = vmatprep.subr.mxu0 0.0
        %1270 = vmatpush1.xpose.msra.mxu0 0.0
        %1271 = vmatprep.subr.mxu0 0.0
        %1272 = vmatpush1.xpose.msra.mxu0 0.0
        %1273 = vmatprep.subr.mxu0 0.0
        %1274 = vmatpush1.xpose.msra.mxu0 0.0
        %1275 = vmatprep.subr.mxu0 0.0
        %1276 = vmatpush1.xpose.msra.mxu0 0.0
        %1277 = vmatprep.subr.mxu0 0.0
        %1278 = vmatpush1.xpose.msra.mxu0 0.0
        %1279 = vmatprep.subr.mxu0 0.0
        %1280 = vmatpush1.xpose.msra.mxu0 0.0
        %1281 = vmatprep.subr.mxu0 0.0
        %1282 = vmatpush1.xpose.msra.mxu0 0.0
        %1283 = vmatprep.subr.mxu0 0.0
        %1284 = vmatpush1.xpose.msra.mxu0 0.0
        %1285 = vmatprep.subr.mxu0 0.0
        %1286 = vmatpush1.xpose.msra.mxu0 0.0
        %1287 = vmatprep.subr.mxu0 0.0
        %1288 = vmatpush1.xpose.msra.mxu0 0.0
        %1289 = vmatprep.subr.mxu0 0.0
        %1290 = vmatpush1.xpose.msra.mxu0 0.0
        %1291 = vmatprep.subr.mxu0 0.0
        %1292 = vmatpush1.xpose.msra.mxu0 0.0
        %1293 = vmatprep.subr.mxu0 0.0
        %1294 = vmatpush1.xpose.msra.mxu0 0.0
        %1295 = vmatprep.subr.mxu0 0.0
        %1296 = vmatpush1.xpose.msra.mxu0 0.0
        %1297 = vmatprep.subr.mxu0 0.0
        %1298 = vmatpush1.xpose.msra.mxu0 0.0
        %1299 = vmatprep.subr.mxu0 0.0
        %1300 = vmatpush1.xpose.msra.mxu0 0.0
        %1301 = vmatprep.subr.mxu0 0.0
        %1302 = vmatpush1.xpose.msra.mxu0 0.0
        %1303 = vmatprep.subr.mxu0 0.0
        %1304 = vmatpush1.xpose.msra.mxu0 0.0
        %1305 = vmatprep.subr.mxu0 0.0
        %1306 = vmatpush1.xpose.msra.mxu0 0.0
        %1307 = vmatprep.subr.mxu0 0.0
        %1308 = vmatpush1.xpose.msra.mxu0 0.0
        %1309 = vmatprep.subr.mxu0 0.0
        %1310 = vmatpush1.xpose.msra.mxu0 0.0
        %1311 = vmatprep.subr.mxu0 0.0
        %1312 = vmatpush1.xpose.msra.mxu0 0.0
        %1313 = vmatprep.subr.mxu0 0.0
        %1314 = vmatpush1.xpose.msra.mxu0 0.0
        %1315 = vmatprep.subr.mxu0 0.0
        %1316 = vmatpush1.xpose.msra.mxu0 0.0
        %1317 = vmatprep.mubr.f32.mxu0 0.0
        %1318 = vmatmul.mubr.f32.gmra.mrb[0].mxu0 %v1249
        %v1319 = vpop.f32.mrb[0].mxu0
        %v1320 = vadd.f32 0.0, %v1319
        %v1321 = vpop.f32.mrb[0].mxu0
        %1322 = vdwg.mxu0
        %v1323 = vsel %vm725, %v1320, -inf
        %1324 = vmax.xlane.f32.xlu0 %v1323
        %v1325 = vpop.xlane.xlu0 %1324
        %v1326 = vsub.f32 %v1320, %v1325
        %v1327 = vmul.f32 %v1326, 1.442695
        %v1328 = vpow.pop %v1327
        %v1329 = vsel %vm725, %v1328, 0.0
        %1330 = vadd.xlane.f32.xlu0 %v1329
        %v1331 = vpop.xlane.xlu0 %1330
        %v1332 = vrcp.pop %v1331
        %v1333 = vmul.f32 %v1328, %v1332
        %s1334 = scalar_lea.vmem %s479, 24 [#allocation18]
        %1335 = vst.msk [vmem:[%s1334] sm:$0xff] %vm725, %v1333
        %1337 = vrot.lane.b32.xlu0 %v1243, 104
        %v1338 = vpop.permute.xlu0 %1337
        %v1341 = vsel %vm725, %v1333, 0
        %1343 = vmatprep.subr.mxu0 0.0
        %1344 = vmatpush1.msra.mxu0 %v1338
        %1345 = vmatprep.subr.mxu0 0.0
        %1346 = vmatpush1.msra.mxu0 0.0
        %1347 = vmatprep.subr.mxu0 0.0
        %1348 = vmatpush1.msra.mxu0 0.0
        %1349 = vmatprep.subr.mxu0 0.0
        %1350 = vmatpush1.msra.mxu0 0.0
        %1351 = vmatprep.subr.mxu0 0.0
        %1352 = vmatpush1.msra.mxu0 0.0
        %1353 = vmatprep.subr.mxu0 0.0
        %1354 = vmatpush1.msra.mxu0 0.0
        %1355 = vmatprep.subr.mxu0 0.0
        %1356 = vmatpush1.msra.mxu0 0.0
        %1357 = vmatprep.subr.mxu0 0.0
        %1358 = vmatpush1.msra.mxu0 0.0
        %1359 = vmatprep.subr.mxu0 0.0
        %1360 = vmatpush1.msra.mxu0 0.0
        %1361 = vmatprep.subr.mxu0 0.0
        %1362 = vmatpush1.msra.mxu0 0.0
        %1363 = vmatprep.subr.mxu0 0.0
        %1364 = vmatpush1.msra.mxu0 0.0
        %1365 = vmatprep.subr.mxu0 0.0
        %1366 = vmatpush1.msra.mxu0 0.0
        %1367 = vmatprep.subr.mxu0 0.0
        %1368 = vmatpush1.msra.mxu0 0.0
        %1369 = vmatprep.subr.mxu0 0.0
        %1370 = vmatpush1.msra.mxu0 0.0
        %1371 = vmatprep.subr.mxu0 0.0
        %1372 = vmatpush1.msra.mxu0 0.0
        %1373 = vmatprep.subr.mxu0 0.0
        %1374 = vmatpush1.msra.mxu0 0.0
        %1375 = vmatprep.subr.mxu0 0.0
        %1376 = vmatpush1.msra.mxu0 0.0
        %1377 = vmatprep.subr.mxu0 0.0
        %1378 = vmatpush1.msra.mxu0 0.0
        %1379 = vmatprep.subr.mxu0 0.0
        %1380 = vmatpush1.msra.mxu0 0.0
        %1381 = vmatprep.subr.mxu0 0.0
        %1382 = vmatpush1.msra.mxu0 0.0
        %1383 = vmatprep.subr.mxu0 0.0
        %1384 = vmatpush1.msra.mxu0 0.0
        %1385 = vmatprep.subr.mxu0 0.0
        %1386 = vmatpush1.msra.mxu0 0.0
        %1387 = vmatprep.subr.mxu0 0.0
        %1388 = vmatpush1.msra.mxu0 0.0
        %1389 = vmatprep.subr.mxu0 0.0
        %1390 = vmatpush1.msra.mxu0 0.0
        %1391 = vmatprep.subr.mxu0 0.0
        %1392 = vmatpush1.msra.mxu0 0.0
        %1393 = vmatprep.subr.mxu0 0.0
        %1394 = vmatpush1.msra.mxu0 0.0
        %1395 = vmatprep.subr.mxu0 0.0
        %1396 = vmatpush1.msra.mxu0 0.0
        %1397 = vmatprep.subr.mxu0 0.0
        %1398 = vmatpush1.msra.mxu0 0.0
        %1399 = vmatprep.subr.mxu0 0.0
        %1400 = vmatpush1.msra.mxu0 0.0
        %1401 = vmatprep.subr.mxu0 0.0
        %1402 = vmatpush1.msra.mxu0 0.0
        %1403 = vmatprep.subr.mxu0 0.0
        %1404 = vmatpush1.msra.mxu0 0.0
        %1405 = vmatprep.subr.mxu0 0.0
        %1406 = vmatpush1.msra.mxu0 0.0
        %1407 = vmatprep.mubr.f32.mxu0 0.0
        %1408 = vmatmul.mubr.f32.gmra.mrb[0].mxu0 %v1341
        %v1409 = vpop.f32.mrb[0].mxu0
        %v1410 = vadd.f32 0.0, %v1409
        %v1411 = vpop.f32.mrb[0].mxu0
        %1412 = vdwg.mxu0
        %1414 = vrot.lane.b32.xlu0 %v1410, 24
        %v1415 = vpop.permute.xlu0 %1414
        %vm1417 = vcmask 261312
        %1418 = vst.msk [vmem:[#allocation4] sm:$0xff] %vm1417, %v1415
        %v1419 = vld [vmem:[#allocation4] sm:$0xff]
        %v1420 = vld [vmem:[#allocation16] sm:$0xff]
        %v1421 = vld [vmem:[#allocation16 + $0x8] sm:$0xff]
        %v1422 = vld [vmem:[#allocation16 + $0x10] sm:$0xff]
        %v1423 = vld [vmem:[#allocation16 + $0x18] sm:$0xff]
        %v1425 = vsel %vm648, %v1419, 0
        %1427 = vmatprep.subr.mxu0 0.0
        %1428 = vmatpush1.msra.mxu0 %v1420
        %1429 = vmatprep.subr.mxu0 0.0
        %1430 = vmatpush1.msra.mxu0 %v1421
        %1431 = vmatprep.subr.mxu0 0.0
        %1432 = vmatpush1.msra.mxu0 %v1422
        %1433 = vmatprep.subr.mxu0 0.0
        %1434 = vmatpush1.msra.mxu0 %v1423
        %1435 = vmatprep.subr.mxu0 0.0
        %1436 = vmatpush1.msra.mxu0 0.0
        %1437 = vmatprep.subr.mxu0 0.0
        %1438 = vmatpush1.msra.mxu0 0.0
        %1439 = vmatprep.subr.mxu0 0.0
        %1440 = vmatpush1.msra.mxu0 0.0
        %1441 = vmatprep.subr.mxu0 0.0
        %1442 = vmatpush1.msra.mxu0 0.0
        %1443 = vmatprep.subr.mxu0 0.0
        %1444 = vmatpush1.msra.mxu0 0.0
        %1445 = vmatprep.subr.mxu0 0.0
        %1446 = vmatpush1.msra.mxu0 0.0
        %1447 = vmatprep.subr.mxu0 0.0
        %1448 = vmatpush1.msra.mxu0 0.0
        %1449 = vmatprep.subr.mxu0 0.0
        %1450 = vmatpush1.msra.mxu0 0.0
        %1451 = vmatprep.subr.mxu0 0.0
        %1452 = vmatpush1.msra.mxu0 0.0
        %1453 = vmatprep.subr.mxu0 0.0
        %1454 = vmatpush1.msra.mxu0 0.0
        %1455 = vmatprep.subr.mxu0 0.0
        %1456 = vmatpush1.msra.mxu0 0.0
        %1457 = vmatprep.subr.mxu0 0.0
        %1458 = vmatpush1.msra.mxu0 0.0
        %1459 = vmatprep.subr.mxu0 0.0
        %1460 = vmatpush1.msra.mxu0 0.0
        %1461 = vmatprep.subr.mxu0 0.0
        %1462 = vmatpush1.msra.mxu0 0.0
        %1463 = vmatprep.subr.mxu0 0.0
        %1464 = vmatpush1.msra.mxu0 0.0
        %1465 = vmatprep.subr.mxu0 0.0
        %1466 = vmatpush1.msra.mxu0 0.0
        %1467 = vmatprep.subr.mxu0 0.0
        %1468 = vmatpush1.msra.mxu0 0.0
        %1469 = vmatprep.subr.mxu0 0.0
        %1470 = vmatpush1.msra.mxu0 0.0
        %1471 = vmatprep.subr.mxu0 0.0
        %1472 = vmatpush1.msra.mxu0 0.0
        %1473 = vmatprep.subr.mxu0 0.0
        %1474 = vmatpush1.msra.mxu0 0.0
        %1475 = vmatprep.subr.mxu0 0.0
        %1476 = vmatpush1.msra.mxu0 0.0
        %1477 = vmatprep.subr.mxu0 0.0
        %1478 = vmatpush1.msra.mxu0 0.0
        %1479 = vmatprep.subr.mxu0 0.0
        %1480 = vmatpush1.msra.mxu0 0.0
        %1481 = vmatprep.subr.mxu0 0.0
        %1482 = vmatpush1.msra.mxu0 0.0
        %1483 = vmatprep.subr.mxu0 0.0
        %1484 = vmatpush1.msra.mxu0 0.0
        %1485 = vmatprep.subr.mxu0 0.0
        %1486 = vmatpush1.msra.mxu0 0.0
        %1487 = vmatprep.subr.mxu0 0.0
        %1488 = vmatpush1.msra.mxu0 0.0
        %1489 = vmatprep.subr.mxu0 0.0
        %1490 = vmatpush1.msra.mxu0 0.0
        %1491 = vmatprep.mubr.f32.mxu0 0.0
        %1492 = vmatmul.mubr.f32.gmra.mrb[0].mxu0 %v1425
        %v1493 = vpop.f32.mrb[0].mxu0
        %v1494 = vadd.f32 0.0, %v1493
        %v1495 = vpop.f32.mrb[0].mxu0
        %1496 = vdwg.mxu0
        %1497 = vst.msk [vmem:[%s472] sm:$0xff] %vm648, %v1494
        %s1498 = sand.u32 %s220, 1
        %s1499 = scalar_lea.sflag [#allocation7], %s1498
        %s1500 = sand.u32 %s220, 1
        %s1501 = smul.addr %s1500, 8
        %s1502 = scalar_lea.vmem [#allocation17], %s1501
        %s1503 = sand.u32 %s248, 1
        %s1504 = scalar_lea.sflag [#allocation19], %s1503
        %s1505 = sand.u32 %s248, 1
        %s1506 = smul.addr %s1505, 32
        %s1507 = scalar_lea.vmem [#allocation18], %s1506
        // Predicated region
        $region81: #{tpu_custom_call.1} parent=47 // pred_check
          %p1508 = pneg %p230
        $region82: #{tpu_custom_call.1} parent=47 // pred_check_branch
          %1510 = sbr.rel (%p1508) target = $region84
        $region83: #{tpu_custom_call.1} parent=47 // pred_region
          %s1512 = ssub.s32 128, 128
          %1513 = vsyncadd %s1499, %s1512
          %s1514 = sadd.s32 %s39, %s38
          %s1515 = smul.addr %s1514, 128
          %s1516 = scalar_lea.hbm %s7, %s1515
          %s1518 = sshll.u32 %s1502, 4
          %s1519 = int_to_ptr.vmem [resolvable:$true] %s1518
          %1521 = dma.vmem_to_hbm [thread:$0]  %s1519, 128, %s1516, %s1499
        $region84: #{tpu_custom_call.1} parent=47 // pred_fallthru
          _
        // Predicated region
        $region85: #{tpu_custom_call.1} parent=47 // pred_check
          %p1522 = pneg %p258
        $region86: #{tpu_custom_call.1} parent=47 // pred_check_branch
          %1524 = sbr.rel (%p1522) target = $region88
        $region87: #{tpu_custom_call.1} parent=47 // pred_region
          %s1526 = ssub.s32 512, 512
          %1527 = vsyncadd %s1504, %s1526
          %s1528 = sadd.s32 %s39, %s38
          %s1529 = smul.addr %s1528, 128
          %s1530 = scalar_lea.hbm %s8, %s1529
          %s1531 = sshll.u32 %s1507, 4
          %s1532 = int_to_ptr.vmem [resolvable:$true] %s1531
          %1537 = dma.vmem_to_hbm [thread:$0]  %s1532, 512, %s1530, %s1504, 128, 256, 8
        $region88: #{tpu_custom_call.1} parent=47 // pred_fallthru
          _
      $region48: #{tpu_custom_call.1} parent=5 // pred_fallthru
        _
      %p1538 = scmp.le.s32.totalorder 2, %s29
      // Predicated region
      $region89: #{tpu_custom_call.1} parent=5 // pred_check
        %p1539 = pneg %p1538
      $region90: #{tpu_custom_call.1} parent=5 // pred_check_branch
        %1541 = sbr.rel (%p1539) target = $region92
      $region91: #{tpu_custom_call.1} parent=5 // pred_region
        %s1542 = ssub.s32 %s29, 2
        // Predicated region
        $region93: #{tpu_custom_call.1} parent=91 // pred_check
          %p1543 = pneg %p236
        $region94: #{tpu_custom_call.1} parent=91 // pred_check_branch
          %1545 = sbr.rel (%p1543) target = $region96
        $region95: #{tpu_custom_call.1} parent=91 // pred_region
          %s1546 = sand.u32 %s221, 1
          %s1547 = scalar_lea.sflag [#allocation7], %s1546
          %s1548 = sand.u32 %s221, 1
          %s1549 = smul.addr %s1548, 8
          %s1550 = scalar_lea.vmem [#allocation17], %s1549
          %1551 = dma.done %s1547, 128
        $region96: #{tpu_custom_call.1} parent=91 // pred_fallthru
          _
        // Predicated region
        $region97: #{tpu_custom_call.1} parent=91 // pred_check
          %p1552 = pneg %p264
        $region98: #{tpu_custom_call.1} parent=91 // pred_check_branch
          %1554 = sbr.rel (%p1552) target = $region100
        $region99: #{tpu_custom_call.1} parent=91 // pred_region
          %s1555 = sand.u32 %s249, 1
          %s1556 = scalar_lea.sflag [#allocation19], %s1555
          %s1557 = sand.u32 %s249, 1
          %s1558 = smul.addr %s1557, 32
          %s1559 = scalar_lea.vmem [#allocation18], %s1558
          %1560 = dma.done %s1556, 512
        $region100: #{tpu_custom_call.1} parent=91 // pred_fallthru
          _
      $region92: #{tpu_custom_call.1} parent=5 // pred_fallthru
        _
    $region6: #{tpu_custom_call.1} parent=1 // loop_footer
      %s33 = sadd.s32 1, %s29
    $region7: #{tpu_custom_call.1} parent=1 // loop_footer_branch
      %28 = sbr.rel target = $region3
    $region8: #{tpu_custom_call.1} parent=1 // loop_exit
      _
    %1561 = vsyncpa [#allocation6], 1
    %s1562 = scalar_lea.sflag [#allocation6], 1
    %1563 = vsyncpa %s1562, 1
    %1564 = vsyncpa [#allocation9], 1
    %s1565 = scalar_lea.sflag [#allocation9], 1
    %1566 = vsyncpa %s1565, 1
    %1567 = vsyncpa [#allocation12], 1
    %1568 = vsyncpa [#allocation15], 1
    %1569 = vsyncpa [#allocation7], 1
    %s1570 = scalar_lea.sflag [#allocation7], 1
    %1571 = vsyncpa %s1570, 1
    %1572 = vsyncpa [#allocation19], 1
    %s1573 = scalar_lea.sflag [#allocation19], 1
    %1574 = vsyncpa %s1573, 1

</llo_original>
